<compile_context>
chip_gen: v5e
topology: v5e:2x2
jax: 0.10.0
libtpu: 0.0.40
codegen_flags: <defaults>
</compile_context>

<pallas_src>
from functools import partial

import jax
import jax.numpy as jnp
from jax import lax
from jax.experimental import pallas as pl
from jax.experimental.pallas import tpu as pltpu


# ---------------------------------------------------------------------------
# Fused VAE kernel (one grid step == one batch block of TB samples)
# ---------------------------------------------------------------------------

def _vae_kernel(x_ref, eps_ref, mask_ref, w_enc_ref, b_enc_ref,
                w_head_ref, b_head_ref, w_mlp_ref, b_mlp_ref,
                w_dec_ref, b_dec_ref, xrec_ref, musig_ref,
                *, C, Cf, H, W, Z, TB):
    HW = H * W
    taps = [(kh * 3 + kw, (kh - 1) * W + (kw - 1))
            for kh in range(3) for kw in range(3)]
    masks = mask_ref[...]                                   # (9, 1, HW)

    def im2col(slab):
        """(Cin, HW) -> (9*Cin, HW): tap t rows are `slab` shifted by s_t
        along lanes (pltpu.roll -> XLU), with image-border taps masked to 0
        (the mask also kills the roll wrap-around)."""
        pieces = []
        for t, s in taps:
            if s == 0:
                pieces.append(slab)                         # center tap: mask==1
            else:
                pieces.append(pltpu.roll(slab, (-s) % HW, axis=1) * masks[t])
        return jnp.concatenate(pieces, axis=0)

    # ---- features_encoder: Conv2d(C, Cf, 3, padding=1) + ReLU --------------
    w_enc = w_enc_ref[...]
    b_enc = b_enc_ref[...]
    h_list = []
    for b in range(TB):
        xb = x_ref[b]                                       # (C, HW)
        hb = jnp.dot(w_enc, im2col(xb),
                     preferred_element_type=jnp.float32) + b_enc
        h_list.append(jnp.maximum(hb, 0.0))                 # (Cf, HW) f32

    # ---- fused mu|log_sigma2 head: per-feature-channel (TB,HW)@(HW,2Z) -----
    # (keeps HW on lanes -- no (Cf,HW)->(1,Cf*HW) lane relayout; M = TB)
    acc = None
    for cf in range(Cf):
        lhs = jnp.concatenate([h_list[b][cf:cf + 1, :] for b in range(TB)],
                              axis=0).astype(jnp.bfloat16)  # (TB, HW)
        part = jnp.dot(lhs, w_head_ref[cf],
                       preferred_element_type=jnp.float32)  # (TB, 2Z)
        acc = part if acc is None else acc + part
    head = acc + b_head_ref[...]                            # (TB, 2Z)

    eps = jnp.concatenate([eps_ref[b] for b in range(TB)], axis=0)  # (TB, Z)
    mu = head[:, :Z]
    log_sigma2 = head[:, Z:]
    # Matches the reference module literally: z = log_sigma2 * eps + mu.
    z = (log_sigma2 * eps + mu).astype(jnp.bfloat16)        # (TB, Z)

    for b in range(TB):
        musig_ref[b] = head[b:b + 1, :]                     # merged mu|log_sigma2

    # ---- decode_MLP: Linear(Z, Cf*HW) as one (TB,Z)@(Z,HW) matmul per cf ----
    lf_list = [jnp.dot(z, w_mlp_ref[cf],
                       preferred_element_type=jnp.float32) + b_mlp_ref[cf]
               for cf in range(Cf)]                         # Cf x (TB, HW) f32

    # ---- features_decoder: Conv2d(Cf, C, 3, padding=1), then tanh ----------
    w_dec = w_dec_ref[...]
    b_dec = b_dec_ref[...]
    for b in range(TB):
        lfb = jnp.concatenate([lf_list[cf][b:b + 1, :] for cf in range(Cf)],
                              axis=0)                       # (Cf, HW)
        xr = jnp.dot(w_dec, im2col(lfb),
                     preferred_element_type=jnp.float32) + b_dec
        xrec_ref[b] = jnp.tanh(xr)                          # (C, HW)


# ---------------------------------------------------------------------------
# One-time host-side parameter re-layout (no hot-path transposes)
# ---------------------------------------------------------------------------

def prepare_params(params, in_size, z_dim):
    C, H, W = in_size
    Cf = params["w_enc"].shape[0]
    HW = H * W

    # per-tap validity masks for the rolled in-kernel im2col
    n = jnp.arange(HW, dtype=jnp.int32)
    h_idx, w_idx = n // W, n % W
    masks = []
    for kh in range(3):
        for kw in range(3):
            dh, dw = kh - 1, kw - 1
            ok = ((h_idx + dh >= 0) & (h_idx + dh < H) &
                  (w_idx + dw >= 0) & (w_idx + dw < W))
            masks.append(ok.astype(jnp.float32))
    masks = jnp.stack(masks, axis=0).reshape(9, 1, HW)

    # conv weights -> (C_out, 9*C_in), columns ordered (tap, c_in)
    w_enc_mat = jnp.transpose(params["w_enc"], (0, 2, 3, 1)).reshape(Cf, 9 * C)
    w_dec_mat = jnp.transpose(params["w_dec"], (0, 2, 3, 1)).reshape(C, 9 * Cf)

    # fused mu|log_sigma2 head, re-laid so the kernel never flattens:
    #   w_head3[cf, hw, :] == w_head_flat[cf*HW + hw, :]
    w_head3 = jnp.concatenate([params["w_mu"], params["w_sig"]], axis=1)
    w_head3 = w_head3.reshape(Cf, HW, 2 * z_dim).astype(jnp.bfloat16)
    b_head = jnp.concatenate([params["b_mu"], params["b_sig"]], axis=1)

    # decode_MLP re-laid per feature channel: (Cf, Z, HW) / (Cf, 1, HW)
    w_mlp3 = jnp.transpose(params["w_mlp"].reshape(z_dim, Cf, HW),
                           (1, 0, 2)).astype(jnp.bfloat16)
    b_mlp3 = params["b_mlp"].reshape(Cf, 1, HW)

    return {
        "masks": masks,
        "w_enc_mat": w_enc_mat,
        "b_enc_col": params["b_enc"].reshape(Cf, 1),
        "w_head3": w_head3,
        "b_head": b_head,
        "w_mlp3": w_mlp3,
        "b_mlp3": b_mlp3,
        "w_dec_mat": w_dec_mat,
        "b_dec_col": params["b_dec"].reshape(C, 1),
    }


# ---------------------------------------------------------------------------
# Forward wrapper
# ---------------------------------------------------------------------------

def vae_forward(x, prep, eps, *, batch_block=8):
    B, C, H, W = x.shape
    HW = H * W
    Cf = prep["w_enc_mat"].shape[0]
    Z = prep["w_mlp3"].shape[1]

    # Batch block: amortize per-grid-step overhead while keeping >=2 grid
    # steps so both TensorCores are fed on megacore parts (v7x).
    tb = max(1, min(batch_block, B // 2)) if B >= 2 else 1
    n_blocks = pl.cdiv(B, tb)
    b_pad = n_blocks * tb

    x3 = x.reshape(B, C, HW)                 # NCHW-native, no transpose
    eps3 = eps.reshape(B, 1, Z)
    if b_pad != B:
        x3 = jnp.concatenate(
            [x3, jnp.zeros((b_pad - B, C, HW), x3.dtype)], axis=0)
        eps3 = jnp.concatenate(
            [eps3, jnp.zeros((b_pad - B, 1, Z), eps3.dtype)], axis=0)

    kernel = partial(_vae_kernel, C=C, Cf=Cf, H=H, W=W, Z=Z, TB=tb)
    c2 = lambda g: (0, 0)
    c3 = lambda g: (0, 0, 0)

    xrec, musig = pl.pallas_call(
        kernel,
        out_shape=(
            jax.ShapeDtypeStruct((b_pad, C, HW), jnp.float32),
            jax.ShapeDtypeStruct((b_pad, 1, 2 * Z), jnp.float32),
        ),
        grid=(n_blocks,),
        in_specs=[
            pl.BlockSpec((tb, C, HW), lambda g: (g, 0, 0)),    # x batch block
            pl.BlockSpec((tb, 1, Z), lambda g: (g, 0, 0)),     # eps batch block
            pl.BlockSpec((9, 1, HW), c3),                      # tap masks
            pl.BlockSpec((Cf, 9 * C), c2),                     # enc conv W
            pl.BlockSpec((Cf, 1), c2),                         # enc conv b
            pl.BlockSpec((Cf, HW, 2 * Z), c3),                 # mu|sigma W (bf16)
            pl.BlockSpec((1, 2 * Z), c2),                      # mu|sigma b
            pl.BlockSpec((Cf, Z, HW), c3),                     # decode MLP W (bf16)
            pl.BlockSpec((Cf, 1, HW), c3),                     # decode MLP b
            pl.BlockSpec((C, 9 * Cf), c2),                     # dec conv W
            pl.BlockSpec((C, 1), c2),                          # dec conv b
        ],
        out_specs=(
            pl.BlockSpec((tb, C, HW), lambda g: (g, 0, 0)),
            pl.BlockSpec((tb, 1, 2 * Z), lambda g: (g, 0, 0)),
        ),
        compiler_params=pltpu.CompilerParams(
            dimension_semantics=("parallel",)),
    )(x3, eps3, prep["masks"], prep["w_enc_mat"], prep["b_enc_col"],
      prep["w_head3"], prep["b_head"], prep["w_mlp3"], prep["b_mlp3"],
      prep["w_dec_mat"], prep["b_dec_col"])

    x_rec = xrec[:B].reshape(B, C, H, W)
    mu = musig[:B, 0, :Z]
    log_sigma2 = musig[:B, 0, Z:]
    return x_rec, mu, log_sigma2


# ---------------------------------------------------------------------------
# Pure-JAX reference (mirrors VAE.forward; same bf16-stored linear weights)
# ---------------------------------------------------------------------------

def reference_forward(x, params, eps):
    B, C, H, W = x.shape
    Cf = params["w_enc"].shape[0]
    Z = eps.shape[1]
    dn = ("NCHW", "OIHW", "NCHW")

    h = lax.conv_general_dilated(
        x, params["w_enc"], window_strides=(1, 1), padding=((1, 1), (1, 1)),
        dimension_numbers=dn, precision=lax.Precision.HIGHEST)
    h = jnp.maximum(h + params["b_enc"].reshape(1, Cf, 1, 1), 0.0)
    hf = h.reshape(B, -1)

    w_head = jnp.concatenate([params["w_mu"], params["w_sig"]],
                             axis=1).astype(jnp.bfloat16)
    b_head = jnp.concatenate([params["b_mu"], params["b_sig"]], axis=1)
    musig = jnp.dot(hf.astype(jnp.bfloat16), w_head,
                    preferred_element_type=jnp.float32) + b_head
    mu = musig[:, :Z]
    log_sigma2 = musig[:, Z:]
    z = log_sigma2 * eps + mu

    lf = jnp.dot(z.astype(jnp.bfloat16), params["w_mlp"].astype(jnp.bfloat16),
                 preferred_element_type=jnp.float32) + params["b_mlp"]
    lf = lf.reshape(B, Cf, H, W)
    xr = lax.conv_general_dilated(
        lf, params["w_dec"], window_strides=(1, 1), padding=((1, 1), (1, 1)),
        dimension_numbers=dn, precision=lax.Precision.HIGHEST)
    xr = jnp.tanh(xr + params["b_dec"].reshape(1, C, 1, 1))
    return xr, mu, log_sigma2


# ---------------------------------------------------------------------------
# Main
# ---------------------------------------------------------------------------

if __name__ == "__main__":
    key = jax.random.PRNGKey(0)
    B, C, H, W = 2, 4, 16, 16       # in_size = (4, 16, 16)
    Cf = 8                          # encoder feature channels
    z_dim = 32
    n_features = Cf * H * W         # 2048

    ks = jax.random.split(key, 10)
    x = jax.random.normal(ks[0], (B, C, H, W), jnp.float32)

    params = {
        # features_encoder: Conv2d(C, Cf, 3, padding=1) + ReLU
        "w_enc": 0.1 * jax.random.normal(ks[1], (Cf, C, 3, 3), jnp.float32),
        "b_enc": 0.1 * jax.random.normal(ks[2], (Cf,), jnp.float32),
        # features_decoder: Conv2d(Cf, C, 3, padding=1)
        "w_dec": 0.1 * jax.random.normal(ks[3], (C, Cf, 3, 3), jnp.float32),
        "b_dec": 0.1 * jax.random.normal(ks[4], (C,), jnp.float32),
        # nn.Linear(n_features, z_dim) for mu and sigma
        "w_mu": 0.02 * jax.random.normal(ks[5], (n_features, z_dim), jnp.float32),
        "b_mu": jnp.zeros((1, z_dim), jnp.float32),
        "w_sig": 0.02 * jax.random.normal(ks[6], (n_features, z_dim), jnp.float32),
        "b_sig": jnp.zeros((1, z_dim), jnp.float32),
        # decode_MLP: nn.Linear(z_dim, n_features)
        "w_mlp": 0.02 * jax.random.normal(ks[7], (z_dim, n_features), jnp.float32),
        "b_mlp": jnp.zeros((1, n_features), jnp.float32),
    }

    # torch.randn(log_sigma2.shape) noise for the reparameterization trick
    eps = jax.random.normal(ks[8], (B, z_dim), jnp.float32)

    prep = prepare_params(params, (C, H, W), z_dim)
    fwd = jax.jit(vae_forward)
    x_rec, mu, log_sigma2 = jax.block_until_ready(fwd(x, prep, eps))

    # shape / sanity checks
    assert x_rec.shape == (B, C, H, W)
    assert mu.shape == (B, z_dim)
    assert log_sigma2.shape == (B, z_dim)
    assert bool(jnp.all(jnp.isfinite(x_rec)))

    # correctness check against a pure-JAX reference of the same forward
    xr_exp, mu_exp, ls_exp = reference_forward(x, params, eps)
    assert bool(jnp.allclose(x_rec, xr_exp, rtol=3e-2, atol=3e-2))
    assert bool(jnp.allclose(mu, mu_exp, rtol=3e-2, atol=3e-2))
    assert bool(jnp.allclose(log_sigma2, ls_exp, rtol=3e-2, atol=3e-2))

    print("KERNEL_OK")
</pallas_src>

<mosaic_0001>
module attributes {stable_mosaic.version = 11 : i64} {
  func.func @_vae_kernel(%arg0: i32, %arg1: memref<1x4x256xf32, #tpu.memory_space<vmem>>, %arg2: memref<1x1x32xf32, #tpu.memory_space<vmem>>, %arg3: memref<9x1x256xf32, #tpu.memory_space<vmem>>, %arg4: memref<8x36xf32, #tpu.memory_space<vmem>>, %arg5: memref<8x1xf32, #tpu.memory_space<vmem>>, %arg6: memref<8x256x64xbf16, #tpu.memory_space<vmem>>, %arg7: memref<1x64xf32, #tpu.memory_space<vmem>>, %arg8: memref<8x32x256xbf16, #tpu.memory_space<vmem>>, %arg9: memref<8x1x256xf32, #tpu.memory_space<vmem>>, %arg10: memref<4x72xf32, #tpu.memory_space<vmem>>, %arg11: memref<4x1xf32, #tpu.memory_space<vmem>>, %arg12: memref<1x4x256xf32, #tpu.memory_space<vmem>>, %arg13: memref<1x1x64xf32, #tpu.memory_space<vmem>>) attributes {dimension_semantics = [#tpu.dimension_semantics<parallel>], iteration_bounds = array<i64: 2>, scalar_prefetch = 0 : i64, scratch_operands = 0 : i64, tpu.core_type = #tpu.core_type<tc>, window_params = [{transform_indices = @transform_0, window_bounds = array<i64: 1, 4, 256>}, {transform_indices = @transform_1, window_bounds = array<i64: 1, 1, 32>}, {pipeline_mode = #tpu.pipeline_mode<synchronous>, transform_indices = @transform_2, window_bounds = array<i64: 9, 1, 256>}, {pipeline_mode = #tpu.pipeline_mode<synchronous>, transform_indices = @transform_3, window_bounds = array<i64: 8, 36>}, {pipeline_mode = #tpu.pipeline_mode<synchronous>, transform_indices = @transform_4, window_bounds = array<i64: 8, 1>}, {pipeline_mode = #tpu.pipeline_mode<synchronous>, transform_indices = @transform_5, window_bounds = array<i64: 8, 256, 64>}, {pipeline_mode = #tpu.pipeline_mode<synchronous>, transform_indices = @transform_6, window_bounds = array<i64: 1, 64>}, {pipeline_mode = #tpu.pipeline_mode<synchronous>, transform_indices = @transform_7, window_bounds = array<i64: 8, 32, 256>}, {pipeline_mode = #tpu.pipeline_mode<synchronous>, transform_indices = @transform_8, window_bounds = array<i64: 8, 1, 256>}, {pipeline_mode = #tpu.pipeline_mode<synchronous>, transform_indices = @transform_9, window_bounds = array<i64: 4, 72>}, {pipeline_mode = #tpu.pipeline_mode<synchronous>, transform_indices = @transform_10, window_bounds = array<i64: 4, 1>}, {transform_indices = @transform_11, window_bounds = array<i64: 1, 4, 256>}, {transform_indices = @transform_12, window_bounds = array<i64: 1, 1, 64>}]} {
    %c0 = arith.constant 0 : index
    %c0_0 = arith.constant 0 : index
    %c0_1 = arith.constant 0 : index
    %0 = vector.load %arg3[%c0, %c0_0, %c0_1] : memref<9x1x256xf32, #tpu.memory_space<vmem>>, vector<9x1x256xf32>
    %c0_2 = arith.constant 0 : index
    %c0_3 = arith.constant 0 : index
    %1 = vector.load %arg4[%c0_2, %c0_3] : memref<8x36xf32, #tpu.memory_space<vmem>>, vector<8x36xf32>
    %c0_4 = arith.constant 0 : index
    %c0_5 = arith.constant 0 : index
    %2 = vector.load %arg5[%c0_4, %c0_5] : memref<8x1xf32, #tpu.memory_space<vmem>>, vector<8x1xf32>
    %c0_6 = arith.constant 0 : index
    %c0_7 = arith.constant 0 : index
    %c0_8 = arith.constant 0 : index
    %3 = vector.load %arg1[%c0_6, %c0_7, %c0_8] : memref<1x4x256xf32, #tpu.memory_space<vmem>>, vector<1x4x256xf32>
    %4 = vector.shape_cast %3 : vector<1x4x256xf32> to vector<4x256xf32>
    %c17_i32 = arith.constant 17 : i32
    %5 = tpu.dynamic_rotate %4 by %c17_i32 dim 1 : vector<4x256xf32>, i32 -> vector<4x256xf32>
    %6 = vector.extract_strided_slice %0 {offsets = [0, 0, 0], sizes = [1, 1, 256], strides = [1, 1, 1]} : vector<9x1x256xf32> to vector<1x1x256xf32>
    %7 = vector.shape_cast %6 : vector<1x1x256xf32> to vector<1x256xf32>
    %8 = vector.broadcast %7 : vector<1x256xf32> to vector<4x256xf32>
    %9 = arith.mulf %5, %8 : vector<4x256xf32>
    %c16_i32 = arith.constant 16 : i32
    %10 = tpu.dynamic_rotate %4 by %c16_i32 dim 1 : vector<4x256xf32>, i32 -> vector<4x256xf32>
    %11 = vector.extract_strided_slice %0 {offsets = [1, 0, 0], sizes = [1, 1, 256], strides = [1, 1, 1]} : vector<9x1x256xf32> to vector<1x1x256xf32>
    %12 = vector.shape_cast %11 : vector<1x1x256xf32> to vector<1x256xf32>
    %13 = vector.broadcast %12 : vector<1x256xf32> to vector<4x256xf32>
    %14 = arith.mulf %10, %13 : vector<4x256xf32>
    %c15_i32 = arith.constant 15 : i32
    %15 = tpu.dynamic_rotate %4 by %c15_i32 dim 1 : vector<4x256xf32>, i32 -> vector<4x256xf32>
    %16 = vector.extract_strided_slice %0 {offsets = [2, 0, 0], sizes = [1, 1, 256], strides = [1, 1, 1]} : vector<9x1x256xf32> to vector<1x1x256xf32>
    %17 = vector.shape_cast %16 : vector<1x1x256xf32> to vector<1x256xf32>
    %18 = vector.broadcast %17 : vector<1x256xf32> to vector<4x256xf32>
    %19 = arith.mulf %15, %18 : vector<4x256xf32>
    %c1_i32 = arith.constant 1 : i32
    %20 = tpu.dynamic_rotate %4 by %c1_i32 dim 1 : vector<4x256xf32>, i32 -> vector<4x256xf32>
    %21 = vector.extract_strided_slice %0 {offsets = [3, 0, 0], sizes = [1, 1, 256], strides = [1, 1, 1]} : vector<9x1x256xf32> to vector<1x1x256xf32>
    %22 = vector.shape_cast %21 : vector<1x1x256xf32> to vector<1x256xf32>
    %23 = vector.broadcast %22 : vector<1x256xf32> to vector<4x256xf32>
    %24 = arith.mulf %20, %23 : vector<4x256xf32>
    %c255_i32 = arith.constant 255 : i32
    %25 = tpu.dynamic_rotate %4 by %c255_i32 dim 1 : vector<4x256xf32>, i32 -> vector<4x256xf32>
    %26 = vector.extract_strided_slice %0 {offsets = [5, 0, 0], sizes = [1, 1, 256], strides = [1, 1, 1]} : vector<9x1x256xf32> to vector<1x1x256xf32>
    %27 = vector.shape_cast %26 : vector<1x1x256xf32> to vector<1x256xf32>
    %28 = vector.broadcast %27 : vector<1x256xf32> to vector<4x256xf32>
    %29 = arith.mulf %25, %28 : vector<4x256xf32>
    %c241_i32 = arith.constant 241 : i32
    %30 = tpu.dynamic_rotate %4 by %c241_i32 dim 1 : vector<4x256xf32>, i32 -> vector<4x256xf32>
    %31 = vector.extract_strided_slice %0 {offsets = [6, 0, 0], sizes = [1, 1, 256], strides = [1, 1, 1]} : vector<9x1x256xf32> to vector<1x1x256xf32>
    %32 = vector.shape_cast %31 : vector<1x1x256xf32> to vector<1x256xf32>
    %33 = vector.broadcast %32 : vector<1x256xf32> to vector<4x256xf32>
    %34 = arith.mulf %30, %33 : vector<4x256xf32>
    %c240_i32 = arith.constant 240 : i32
    %35 = tpu.dynamic_rotate %4 by %c240_i32 dim 1 : vector<4x256xf32>, i32 -> vector<4x256xf32>
    %36 = vector.extract_strided_slice %0 {offsets = [7, 0, 0], sizes = [1, 1, 256], strides = [1, 1, 1]} : vector<9x1x256xf32> to vector<1x1x256xf32>
    %37 = vector.shape_cast %36 : vector<1x1x256xf32> to vector<1x256xf32>
    %38 = vector.broadcast %37 : vector<1x256xf32> to vector<4x256xf32>
    %39 = arith.mulf %35, %38 : vector<4x256xf32>
    %c239_i32 = arith.constant 239 : i32
    %40 = tpu.dynamic_rotate %4 by %c239_i32 dim 1 : vector<4x256xf32>, i32 -> vector<4x256xf32>
    %41 = vector.extract_strided_slice %0 {offsets = [8, 0, 0], sizes = [1, 1, 256], strides = [1, 1, 1]} : vector<9x1x256xf32> to vector<1x1x256xf32>
    %42 = vector.shape_cast %41 : vector<1x1x256xf32> to vector<1x256xf32>
    %43 = vector.broadcast %42 : vector<1x256xf32> to vector<4x256xf32>
    %44 = arith.mulf %40, %43 : vector<4x256xf32>
    %45 = tpu.concatenate %9, %14, %19, %24, %4, %29, %34, %39, %44 in 0 : vector<4x256xf32>, vector<4x256xf32>, vector<4x256xf32>, vector<4x256xf32>, vector<4x256xf32>, vector<4x256xf32>, vector<4x256xf32>, vector<4x256xf32>, vector<4x256xf32> -> vector<36x256xf32>
    %cst = arith.constant dense<0.000000e+00> : vector<8x256xf32>
    %46 = tpu.matmul %1, %45, %cst {dimension_numbers = #tpu.dot_dimension_numbers<[1], [0], [0], [1], [0, 0, 1, 1], [], []>} : vector<8x36xf32>, vector<36x256xf32>, vector<8x256xf32> -> vector<8x256xf32>
    %47 = vector.broadcast %2 : vector<8x1xf32> to vector<8x256xf32>
    %48 = arith.addf %46, %47 : vector<8x256xf32>
    %cst_9 = arith.constant 0.000000e+00 : f32
    %49 = vector.broadcast %cst_9 : f32 to vector<8x256xf32>
    %50 = arith.maximumf %48, %49 : vector<8x256xf32>
    %51 = vector.extract_strided_slice %50 {offsets = [0, 0], sizes = [1, 256], strides = [1, 1]} : vector<8x256xf32> to vector<1x256xf32>
    %52 = arith.truncf %51 : vector<1x256xf32> to vector<1x256xbf16>
    %c0_10 = arith.constant 0 : index
    %c0_11 = arith.constant 0 : index
    %c0_12 = arith.constant 0 : index
    %53 = vector.load %arg6[%c0_10, %c0_11, %c0_12] : memref<8x256x64xbf16, #tpu.memory_space<vmem>>, vector<1x256x64xbf16>
    %54 = vector.shape_cast %53 : vector<1x256x64xbf16> to vector<256x64xbf16>
    %cst_13 = arith.constant dense<0.000000e+00> : vector<1x64xf32>
    %55 = tpu.matmul %52, %54, %cst_13 {dimension_numbers = #tpu.dot_dimension_numbers<[1], [0], [0], [1], [0, 0, 1, 1], [], []>} : vector<1x256xbf16>, vector<256x64xbf16>, vector<1x64xf32> -> vector<1x64xf32>
    %56 = vector.extract_strided_slice %50 {offsets = [1, 0], sizes = [1, 256], strides = [1, 1]} : vector<8x256xf32> to vector<1x256xf32>
    %57 = arith.truncf %56 : vector<1x256xf32> to vector<1x256xbf16>
    %c1 = arith.constant 1 : index
    %c0_14 = arith.constant 0 : index
    %c0_15 = arith.constant 0 : index
    %58 = vector.load %arg6[%c1, %c0_14, %c0_15] : memref<8x256x64xbf16, #tpu.memory_space<vmem>>, vector<1x256x64xbf16>
    %59 = vector.shape_cast %58 : vector<1x256x64xbf16> to vector<256x64xbf16>
    %cst_16 = arith.constant dense<0.000000e+00> : vector<1x64xf32>
    %60 = tpu.matmul %57, %59, %cst_16 {dimension_numbers = #tpu.dot_dimension_numbers<[1], [0], [0], [1], [0, 0, 1, 1], [], []>} : vector<1x256xbf16>, vector<256x64xbf16>, vector<1x64xf32> -> vector<1x64xf32>
    %61 = arith.addf %55, %60 : vector<1x64xf32>
    %62 = vector.extract_strided_slice %50 {offsets = [2, 0], sizes = [1, 256], strides = [1, 1]} : vector<8x256xf32> to vector<1x256xf32>
    %63 = arith.truncf %62 : vector<1x256xf32> to vector<1x256xbf16>
    %c2 = arith.constant 2 : index
    %c0_17 = arith.constant 0 : index
    %c0_18 = arith.constant 0 : index
    %64 = vector.load %arg6[%c2, %c0_17, %c0_18] : memref<8x256x64xbf16, #tpu.memory_space<vmem>>, vector<1x256x64xbf16>
    %65 = vector.shape_cast %64 : vector<1x256x64xbf16> to vector<256x64xbf16>
    %cst_19 = arith.constant dense<0.000000e+00> : vector<1x64xf32>
    %66 = tpu.matmul %63, %65, %cst_19 {dimension_numbers = #tpu.dot_dimension_numbers<[1], [0], [0], [1], [0, 0, 1, 1], [], []>} : vector<1x256xbf16>, vector<256x64xbf16>, vector<1x64xf32> -> vector<1x64xf32>
    %67 = arith.addf %61, %66 : vector<1x64xf32>
    %68 = vector.extract_strided_slice %50 {offsets = [3, 0], sizes = [1, 256], strides = [1, 1]} : vector<8x256xf32> to vector<1x256xf32>
    %69 = arith.truncf %68 : vector<1x256xf32> to vector<1x256xbf16>
    %c3 = arith.constant 3 : index
    %c0_20 = arith.constant 0 : index
    %c0_21 = arith.constant 0 : index
    %70 = vector.load %arg6[%c3, %c0_20, %c0_21] : memref<8x256x64xbf16, #tpu.memory_space<vmem>>, vector<1x256x64xbf16>
    %71 = vector.shape_cast %70 : vector<1x256x64xbf16> to vector<256x64xbf16>
    %cst_22 = arith.constant dense<0.000000e+00> : vector<1x64xf32>
    %72 = tpu.matmul %69, %71, %cst_22 {dimension_numbers = #tpu.dot_dimension_numbers<[1], [0], [0], [1], [0, 0, 1, 1], [], []>} : vector<1x256xbf16>, vector<256x64xbf16>, vector<1x64xf32> -> vector<1x64xf32>
    %73 = arith.addf %67, %72 : vector<1x64xf32>
    %74 = vector.extract_strided_slice %50 {offsets = [4, 0], sizes = [1, 256], strides = [1, 1]} : vector<8x256xf32> to vector<1x256xf32>
    %75 = arith.truncf %74 : vector<1x256xf32> to vector<1x256xbf16>
    %c4 = arith.constant 4 : index
    %c0_23 = arith.constant 0 : index
    %c0_24 = arith.constant 0 : index
    %76 = vector.load %arg6[%c4, %c0_23, %c0_24] : memref<8x256x64xbf16, #tpu.memory_space<vmem>>, vector<1x256x64xbf16>
    %77 = vector.shape_cast %76 : vector<1x256x64xbf16> to vector<256x64xbf16>
    %cst_25 = arith.constant dense<0.000000e+00> : vector<1x64xf32>
    %78 = tpu.matmul %75, %77, %cst_25 {dimension_numbers = #tpu.dot_dimension_numbers<[1], [0], [0], [1], [0, 0, 1, 1], [], []>} : vector<1x256xbf16>, vector<256x64xbf16>, vector<1x64xf32> -> vector<1x64xf32>
    %79 = arith.addf %73, %78 : vector<1x64xf32>
    %80 = vector.extract_strided_slice %50 {offsets = [5, 0], sizes = [1, 256], strides = [1, 1]} : vector<8x256xf32> to vector<1x256xf32>
    %81 = arith.truncf %80 : vector<1x256xf32> to vector<1x256xbf16>
    %c5 = arith.constant 5 : index
    %c0_26 = arith.constant 0 : index
    %c0_27 = arith.constant 0 : index
    %82 = vector.load %arg6[%c5, %c0_26, %c0_27] : memref<8x256x64xbf16, #tpu.memory_space<vmem>>, vector<1x256x64xbf16>
    %83 = vector.shape_cast %82 : vector<1x256x64xbf16> to vector<256x64xbf16>
    %cst_28 = arith.constant dense<0.000000e+00> : vector<1x64xf32>
    %84 = tpu.matmul %81, %83, %cst_28 {dimension_numbers = #tpu.dot_dimension_numbers<[1], [0], [0], [1], [0, 0, 1, 1], [], []>} : vector<1x256xbf16>, vector<256x64xbf16>, vector<1x64xf32> -> vector<1x64xf32>
    %85 = arith.addf %79, %84 : vector<1x64xf32>
    %86 = vector.extract_strided_slice %50 {offsets = [6, 0], sizes = [1, 256], strides = [1, 1]} : vector<8x256xf32> to vector<1x256xf32>
    %87 = arith.truncf %86 : vector<1x256xf32> to vector<1x256xbf16>
    %c6 = arith.constant 6 : index
    %c0_29 = arith.constant 0 : index
    %c0_30 = arith.constant 0 : index
    %88 = vector.load %arg6[%c6, %c0_29, %c0_30] : memref<8x256x64xbf16, #tpu.memory_space<vmem>>, vector<1x256x64xbf16>
    %89 = vector.shape_cast %88 : vector<1x256x64xbf16> to vector<256x64xbf16>
    %cst_31 = arith.constant dense<0.000000e+00> : vector<1x64xf32>
    %90 = tpu.matmul %87, %89, %cst_31 {dimension_numbers = #tpu.dot_dimension_numbers<[1], [0], [0], [1], [0, 0, 1, 1], [], []>} : vector<1x256xbf16>, vector<256x64xbf16>, vector<1x64xf32> -> vector<1x64xf32>
    %91 = arith.addf %85, %90 : vector<1x64xf32>
    %92 = vector.extract_strided_slice %50 {offsets = [7, 0], sizes = [1, 256], strides = [1, 1]} : vector<8x256xf32> to vector<1x256xf32>
    %93 = arith.truncf %92 : vector<1x256xf32> to vector<1x256xbf16>
    %c7 = arith.constant 7 : index
    %c0_32 = arith.constant 0 : index
    %c0_33 = arith.constant 0 : index
    %94 = vector.load %arg6[%c7, %c0_32, %c0_33] : memref<8x256x64xbf16, #tpu.memory_space<vmem>>, vector<1x256x64xbf16>
    %95 = vector.shape_cast %94 : vector<1x256x64xbf16> to vector<256x64xbf16>
    %cst_34 = arith.constant dense<0.000000e+00> : vector<1x64xf32>
    %96 = tpu.matmul %93, %95, %cst_34 {dimension_numbers = #tpu.dot_dimension_numbers<[1], [0], [0], [1], [0, 0, 1, 1], [], []>} : vector<1x256xbf16>, vector<256x64xbf16>, vector<1x64xf32> -> vector<1x64xf32>
    %97 = arith.addf %91, %96 : vector<1x64xf32>
    %c0_35 = arith.constant 0 : index
    %c0_36 = arith.constant 0 : index
    %98 = vector.load %arg7[%c0_35, %c0_36] : memref<1x64xf32, #tpu.memory_space<vmem>>, vector<1x64xf32>
    %99 = arith.addf %97, %98 : vector<1x64xf32>
    %c0_37 = arith.constant 0 : index
    %c0_38 = arith.constant 0 : index
    %c0_39 = arith.constant 0 : index
    %100 = vector.load %arg2[%c0_37, %c0_38, %c0_39] : memref<1x1x32xf32, #tpu.memory_space<vmem>>, vector<1x1x32xf32>
    %101 = vector.shape_cast %100 : vector<1x1x32xf32> to vector<1x32xf32>
    %102 = vector.extract_strided_slice %99 {offsets = [0, 0], sizes = [1, 32], strides = [1, 1]} : vector<1x64xf32> to vector<1x32xf32>
    %103 = vector.extract_strided_slice %99 {offsets = [0, 32], sizes = [1, 32], strides = [1, 1]} : vector<1x64xf32> to vector<1x32xf32>
    %104 = arith.mulf %103, %101 : vector<1x32xf32>
    %105 = arith.addf %104, %102 : vector<1x32xf32>
    %106 = arith.truncf %105 : vector<1x32xf32> to vector<1x32xbf16>
    %c0_40 = arith.constant 0 : index
    %c0_41 = arith.constant 0 : index
    %c0_42 = arith.constant 0 : index
    %107 = vector.load %arg13[%c0_40, %c0_41, %c0_42] : memref<1x1x64xf32, #tpu.memory_space<vmem>>, vector<1x1x64xf32>
    %108 = vector.shape_cast %107 : vector<1x1x64xf32> to vector<1x64xf32>
    %109 = vector.shape_cast %99 : vector<1x64xf32> to vector<1x1x64xf32>
    tpu.vector_store %arg13[%c0_40, %c0_41, %c0_42], %109 {strides = array<i32>} : memref<1x1x64xf32, #tpu.memory_space<vmem>>, vector<1x1x64xf32>,
    %c0_43 = arith.constant 0 : index
    %c0_44 = arith.constant 0 : index
    %c0_45 = arith.constant 0 : index
    %110 = vector.load %arg8[%c0_43, %c0_44, %c0_45] : memref<8x32x256xbf16, #tpu.memory_space<vmem>>, vector<1x32x256xbf16>
    %111 = vector.shape_cast %110 : vector<1x32x256xbf16> to vector<32x256xbf16>
    %cst_46 = arith.constant dense<0.000000e+00> : vector<1x256xf32>
    %112 = tpu.matmul %106, %111, %cst_46 {dimension_numbers = #tpu.dot_dimension_numbers<[1], [0], [0], [1], [0, 0, 1, 1], [], []>} : vector<1x32xbf16>, vector<32x256xbf16>, vector<1x256xf32> -> vector<1x256xf32>
    %c0_47 = arith.constant 0 : index
    %c0_48 = arith.constant 0 : index
    %c0_49 = arith.constant 0 : index
    %113 = vector.load %arg9[%c0_47, %c0_48, %c0_49] : memref<8x1x256xf32, #tpu.memory_space<vmem>>, vector<1x1x256xf32>
    %114 = vector.shape_cast %113 : vector<1x1x256xf32> to vector<1x256xf32>
    %115 = arith.addf %112, %114 : vector<1x256xf32>
    %c1_50 = arith.constant 1 : index
    %c0_51 = arith.constant 0 : index
    %c0_52 = arith.constant 0 : index
    %116 = vector.load %arg8[%c1_50, %c0_51, %c0_52] : memref<8x32x256xbf16, #tpu.memory_space<vmem>>, vector<1x32x256xbf16>
    %117 = vector.shape_cast %116 : vector<1x32x256xbf16> to vector<32x256xbf16>
    %cst_53 = arith.constant dense<0.000000e+00> : vector<1x256xf32>
    %118 = tpu.matmul %106, %117, %cst_53 {dimension_numbers = #tpu.dot_dimension_numbers<[1], [0], [0], [1], [0, 0, 1, 1], [], []>} : vector<1x32xbf16>, vector<32x256xbf16>, vector<1x256xf32> -> vector<1x256xf32>
    %c1_54 = arith.constant 1 : index
    %c0_55 = arith.constant 0 : index
    %c0_56 = arith.constant 0 : index
    %119 = vector.load %arg9[%c1_54, %c0_55, %c0_56] : memref<8x1x256xf32, #tpu.memory_space<vmem>>, vector<1x1x256xf32>
    %120 = vector.shape_cast %119 : vector<1x1x256xf32> to vector<1x256xf32>
    %121 = arith.addf %118, %120 : vector<1x256xf32>
    %c2_57 = arith.constant 2 : index
    %c0_58 = arith.constant 0 : index
    %c0_59 = arith.constant 0 : index
    %122 = vector.load %arg8[%c2_57, %c0_58, %c0_59] : memref<8x32x256xbf16, #tpu.memory_space<vmem>>, vector<1x32x256xbf16>
    %123 = vector.shape_cast %122 : vector<1x32x256xbf16> to vector<32x256xbf16>
    %cst_60 = arith.constant dense<0.000000e+00> : vector<1x256xf32>
    %124 = tpu.matmul %106, %123, %cst_60 {dimension_numbers = #tpu.dot_dimension_numbers<[1], [0], [0], [1], [0, 0, 1, 1], [], []>} : vector<1x32xbf16>, vector<32x256xbf16>, vector<1x256xf32> -> vector<1x256xf32>
    %c2_61 = arith.constant 2 : index
    %c0_62 = arith.constant 0 : index
    %c0_63 = arith.constant 0 : index
    %125 = vector.load %arg9[%c2_61, %c0_62, %c0_63] : memref<8x1x256xf32, #tpu.memory_space<vmem>>, vector<1x1x256xf32>
    %126 = vector.shape_cast %125 : vector<1x1x256xf32> to vector<1x256xf32>
    %127 = arith.addf %124, %126 : vector<1x256xf32>
    %c3_64 = arith.constant 3 : index
    %c0_65 = arith.constant 0 : index
    %c0_66 = arith.constant 0 : index
    %128 = vector.load %arg8[%c3_64, %c0_65, %c0_66] : memref<8x32x256xbf16, #tpu.memory_space<vmem>>, vector<1x32x256xbf16>
    %129 = vector.shape_cast %128 : vector<1x32x256xbf16> to vector<32x256xbf16>
    %cst_67 = arith.constant dense<0.000000e+00> : vector<1x256xf32>
    %130 = tpu.matmul %106, %129, %cst_67 {dimension_numbers = #tpu.dot_dimension_numbers<[1], [0], [0], [1], [0, 0, 1, 1], [], []>} : vector<1x32xbf16>, vector<32x256xbf16>, vector<1x256xf32> -> vector<1x256xf32>
    %c3_68 = arith.constant 3 : index
    %c0_69 = arith.constant 0 : index
    %c0_70 = arith.constant 0 : index
    %131 = vector.load %arg9[%c3_68, %c0_69, %c0_70] : memref<8x1x256xf32, #tpu.memory_space<vmem>>, vector<1x1x256xf32>
    %132 = vector.shape_cast %131 : vector<1x1x256xf32> to vector<1x256xf32>
    %133 = arith.addf %130, %132 : vector<1x256xf32>
    %c4_71 = arith.constant 4 : index
    %c0_72 = arith.constant 0 : index
    %c0_73 = arith.constant 0 : index
    %134 = vector.load %arg8[%c4_71, %c0_72, %c0_73] : memref<8x32x256xbf16, #tpu.memory_space<vmem>>, vector<1x32x256xbf16>
    %135 = vector.shape_cast %134 : vector<1x32x256xbf16> to vector<32x256xbf16>
    %cst_74 = arith.constant dense<0.000000e+00> : vector<1x256xf32>
    %136 = tpu.matmul %106, %135, %cst_74 {dimension_numbers = #tpu.dot_dimension_numbers<[1], [0], [0], [1], [0, 0, 1, 1], [], []>} : vector<1x32xbf16>, vector<32x256xbf16>, vector<1x256xf32> -> vector<1x256xf32>
    %c4_75 = arith.constant 4 : index
    %c0_76 = arith.constant 0 : index
    %c0_77 = arith.constant 0 : index
    %137 = vector.load %arg9[%c4_75, %c0_76, %c0_77] : memref<8x1x256xf32, #tpu.memory_space<vmem>>, vector<1x1x256xf32>
    %138 = vector.shape_cast %137 : vector<1x1x256xf32> to vector<1x256xf32>
    %139 = arith.addf %136, %138 : vector<1x256xf32>
    %c5_78 = arith.constant 5 : index
    %c0_79 = arith.constant 0 : index
    %c0_80 = arith.constant 0 : index
    %140 = vector.load %arg8[%c5_78, %c0_79, %c0_80] : memref<8x32x256xbf16, #tpu.memory_space<vmem>>, vector<1x32x256xbf16>
    %141 = vector.shape_cast %140 : vector<1x32x256xbf16> to vector<32x256xbf16>
    %cst_81 = arith.constant dense<0.000000e+00> : vector<1x256xf32>
    %142 = tpu.matmul %106, %141, %cst_81 {dimension_numbers = #tpu.dot_dimension_numbers<[1], [0], [0], [1], [0, 0, 1, 1], [], []>} : vector<1x32xbf16>, vector<32x256xbf16>, vector<1x256xf32> -> vector<1x256xf32>
    %c5_82 = arith.constant 5 : index
    %c0_83 = arith.constant 0 : index
    %c0_84 = arith.constant 0 : index
    %143 = vector.load %arg9[%c5_82, %c0_83, %c0_84] : memref<8x1x256xf32, #tpu.memory_space<vmem>>, vector<1x1x256xf32>
    %144 = vector.shape_cast %143 : vector<1x1x256xf32> to vector<1x256xf32>
    %145 = arith.addf %142, %144 : vector<1x256xf32>
    %c6_85 = arith.constant 6 : index
    %c0_86 = arith.constant 0 : index
    %c0_87 = arith.constant 0 : index
    %146 = vector.load %arg8[%c6_85, %c0_86, %c0_87] : memref<8x32x256xbf16, #tpu.memory_space<vmem>>, vector<1x32x256xbf16>
    %147 = vector.shape_cast %146 : vector<1x32x256xbf16> to vector<32x256xbf16>
    %cst_88 = arith.constant dense<0.000000e+00> : vector<1x256xf32>
    %148 = tpu.matmul %106, %147, %cst_88 {dimension_numbers = #tpu.dot_dimension_numbers<[1], [0], [0], [1], [0, 0, 1, 1], [], []>} : vector<1x32xbf16>, vector<32x256xbf16>, vector<1x256xf32> -> vector<1x256xf32>
    %c6_89 = arith.constant 6 : index
    %c0_90 = arith.constant 0 : index
    %c0_91 = arith.constant 0 : index
    %149 = vector.load %arg9[%c6_89, %c0_90, %c0_91] : memref<8x1x256xf32, #tpu.memory_space<vmem>>, vector<1x1x256xf32>
    %150 = vector.shape_cast %149 : vector<1x1x256xf32> to vector<1x256xf32>
    %151 = arith.addf %148, %150 : vector<1x256xf32>
    %c7_92 = arith.constant 7 : index
    %c0_93 = arith.constant 0 : index
    %c0_94 = arith.constant 0 : index
    %152 = vector.load %arg8[%c7_92, %c0_93, %c0_94] : memref<8x32x256xbf16, #tpu.memory_space<vmem>>, vector<1x32x256xbf16>
    %153 = vector.shape_cast %152 : vector<1x32x256xbf16> to vector<32x256xbf16>
    %cst_95 = arith.constant dense<0.000000e+00> : vector<1x256xf32>
    %154 = tpu.matmul %106, %153, %cst_95 {dimension_numbers = #tpu.dot_dimension_numbers<[1], [0], [0], [1], [0, 0, 1, 1], [], []>} : vector<1x32xbf16>, vector<32x256xbf16>, vector<1x256xf32> -> vector<1x256xf32>
    %c7_96 = arith.constant 7 : index
    %c0_97 = arith.constant 0 : index
    %c0_98 = arith.constant 0 : index
    %155 = vector.load %arg9[%c7_96, %c0_97, %c0_98] : memref<8x1x256xf32, #tpu.memory_space<vmem>>, vector<1x1x256xf32>
    %156 = vector.shape_cast %155 : vector<1x1x256xf32> to vector<1x256xf32>
    %157 = arith.addf %154, %156 : vector<1x256xf32>
    %c0_99 = arith.constant 0 : index
    %c0_100 = arith.constant 0 : index
    %158 = vector.load %arg10[%c0_99, %c0_100] : memref<4x72xf32, #tpu.memory_space<vmem>>, vector<4x72xf32>
    %c0_101 = arith.constant 0 : index
    %c0_102 = arith.constant 0 : index
    %159 = vector.load %arg11[%c0_101, %c0_102] : memref<4x1xf32, #tpu.memory_space<vmem>>, vector<4x1xf32>
    %160 = tpu.concatenate %115, %121, %127, %133, %139, %145, %151, %157 in 0 : vector<1x256xf32>, vector<1x256xf32>, vector<1x256xf32>, vector<1x256xf32>, vector<1x256xf32>, vector<1x256xf32>, vector<1x256xf32>, vector<1x256xf32> -> vector<8x256xf32>
    %c17_i32_103 = arith.constant 17 : i32
    %161 = tpu.dynamic_rotate %160 by %c17_i32_103 dim 1 : vector<8x256xf32>, i32 -> vector<8x256xf32>
    %162 = vector.extract_strided_slice %0 {offsets = [0, 0, 0], sizes = [1, 1, 256], strides = [1, 1, 1]} : vector<9x1x256xf32> to vector<1x1x256xf32>
    %163 = vector.shape_cast %162 : vector<1x1x256xf32> to vector<1x256xf32>
    %164 = vector.broadcast %163 : vector<1x256xf32> to vector<8x256xf32>
    %165 = arith.mulf %161, %164 : vector<8x256xf32>
    %c16_i32_104 = arith.constant 16 : i32
    %166 = tpu.dynamic_rotate %160 by %c16_i32_104 dim 1 : vector<8x256xf32>, i32 -> vector<8x256xf32>
    %167 = vector.extract_strided_slice %0 {offsets = [1, 0, 0], sizes = [1, 1, 256], strides = [1, 1, 1]} : vector<9x1x256xf32> to vector<1x1x256xf32>
    %168 = vector.shape_cast %167 : vector<1x1x256xf32> to vector<1x256xf32>
    %169 = vector.broadcast %168 : vector<1x256xf32> to vector<8x256xf32>
    %170 = arith.mulf %166, %169 : vector<8x256xf32>
    %c15_i32_105 = arith.constant 15 : i32
    %171 = tpu.dynamic_rotate %160 by %c15_i32_105 dim 1 : vector<8x256xf32>, i32 -> vector<8x256xf32>
    %172 = vector.extract_strided_slice %0 {offsets = [2, 0, 0], sizes = [1, 1, 256], strides = [1, 1, 1]} : vector<9x1x256xf32> to vector<1x1x256xf32>
    %173 = vector.shape_cast %172 : vector<1x1x256xf32> to vector<1x256xf32>
    %174 = vector.broadcast %173 : vector<1x256xf32> to vector<8x256xf32>
    %175 = arith.mulf %171, %174 : vector<8x256xf32>
    %c1_i32_106 = arith.constant 1 : i32
    %176 = tpu.dynamic_rotate %160 by %c1_i32_106 dim 1 : vector<8x256xf32>, i32 -> vector<8x256xf32>
    %177 = vector.extract_strided_slice %0 {offsets = [3, 0, 0], sizes = [1, 1, 256], strides = [1, 1, 1]} : vector<9x1x256xf32> to vector<1x1x256xf32>
    %178 = vector.shape_cast %177 : vector<1x1x256xf32> to vector<1x256xf32>
    %179 = vector.broadcast %178 : vector<1x256xf32> to vector<8x256xf32>
    %180 = arith.mulf %176, %179 : vector<8x256xf32>
    %c255_i32_107 = arith.constant 255 : i32
    %181 = tpu.dynamic_rotate %160 by %c255_i32_107 dim 1 : vector<8x256xf32>, i32 -> vector<8x256xf32>
    %182 = vector.extract_strided_slice %0 {offsets = [5, 0, 0], sizes = [1, 1, 256], strides = [1, 1, 1]} : vector<9x1x256xf32> to vector<1x1x256xf32>
    %183 = vector.shape_cast %182 : vector<1x1x256xf32> to vector<1x256xf32>
    %184 = vector.broadcast %183 : vector<1x256xf32> to vector<8x256xf32>
    %185 = arith.mulf %181, %184 : vector<8x256xf32>
    %c241_i32_108 = arith.constant 241 : i32
    %186 = tpu.dynamic_rotate %160 by %c241_i32_108 dim 1 : vector<8x256xf32>, i32 -> vector<8x256xf32>
    %187 = vector.extract_strided_slice %0 {offsets = [6, 0, 0], sizes = [1, 1, 256], strides = [1, 1, 1]} : vector<9x1x256xf32> to vector<1x1x256xf32>
    %188 = vector.shape_cast %187 : vector<1x1x256xf32> to vector<1x256xf32>
    %189 = vector.broadcast %188 : vector<1x256xf32> to vector<8x256xf32>
    %190 = arith.mulf %186, %189 : vector<8x256xf32>
    %c240_i32_109 = arith.constant 240 : i32
    %191 = tpu.dynamic_rotate %160 by %c240_i32_109 dim 1 : vector<8x256xf32>, i32 -> vector<8x256xf32>
    %192 = vector.extract_strided_slice %0 {offsets = [7, 0, 0], sizes = [1, 1, 256], strides = [1, 1, 1]} : vector<9x1x256xf32> to vector<1x1x256xf32>
    %193 = vector.shape_cast %192 : vector<1x1x256xf32> to vector<1x256xf32>
    %194 = vector.broadcast %193 : vector<1x256xf32> to vector<8x256xf32>
    %195 = arith.mulf %191, %194 : vector<8x256xf32>
    %c239_i32_110 = arith.constant 239 : i32
    %196 = tpu.dynamic_rotate %160 by %c239_i32_110 dim 1 : vector<8x256xf32>, i32 -> vector<8x256xf32>
    %197 = vector.extract_strided_slice %0 {offsets = [8, 0, 0], sizes = [1, 1, 256], strides = [1, 1, 1]} : vector<9x1x256xf32> to vector<1x1x256xf32>
    %198 = vector.shape_cast %197 : vector<1x1x256xf32> to vector<1x256xf32>
    %199 = vector.broadcast %198 : vector<1x256xf32> to vector<8x256xf32>
    %200 = arith.mulf %196, %199 : vector<8x256xf32>
    %201 = tpu.concatenate %165, %170, %175, %180, %160, %185, %190, %195, %200 in 0 : vector<8x256xf32>, vector<8x256xf32>, vector<8x256xf32>, vector<8x256xf32>, vector<8x256xf32>, vector<8x256xf32>, vector<8x256xf32>, vector<8x256xf32>, vector<8x256xf32> -> vector<72x256xf32>
    %cst_111 = arith.constant dense<0.000000e+00> : vector<4x256xf32>
    %202 = tpu.matmul %158, %201, %cst_111 {dimension_numbers = #tpu.dot_dimension_numbers<[1], [0], [0], [1], [0, 0, 1, 1], [], []>} : vector<4x72xf32>, vector<72x256xf32>, vector<4x256xf32> -> vector<4x256xf32>
    %203 = vector.broadcast %159 : vector<4x1xf32> to vector<4x256xf32>
    %204 = arith.addf %202, %203 : vector<4x256xf32>
    %205 = math.tanh %204 : vector<4x256xf32>
    %c0_112 = arith.constant 0 : index
    %c0_113 = arith.constant 0 : index
    %c0_114 = arith.constant 0 : index
    %206 = vector.load %arg12[%c0_112, %c0_113, %c0_114] : memref<1x4x256xf32, #tpu.memory_space<vmem>>, vector<1x4x256xf32>
    %207 = vector.shape_cast %206 : vector<1x4x256xf32> to vector<4x256xf32>
    %208 = vector.shape_cast %205 : vector<4x256xf32> to vector<1x4x256xf32>
    tpu.vector_store %arg12[%c0_112, %c0_113, %c0_114], %208 {strides = array<i32>} : memref<1x4x256xf32, #tpu.memory_space<vmem>>, vector<1x4x256xf32>,
    return
  }
  func.func @transform_0(%arg0: i32) -> (i32, i32, i32) {
    %c0_i32 = arith.constant 0 : i32
    %c0_i32_0 = arith.constant 0 : i32
    %c0_i32_1 = arith.constant 0 : i32
    return %arg0, %c0_i32, %c0_i32_0 : i32, i32, i32
  }
  func.func @transform_1(%arg0: i32) -> (i32, i32, i32) {
    %c0_i32 = arith.constant 0 : i32
    %c0_i32_0 = arith.constant 0 : i32
    %c0_i32_1 = arith.constant 0 : i32
    return %arg0, %c0_i32, %c0_i32_0 : i32, i32, i32
  }
  func.func @transform_2(%arg0: i32) -> (i32, i32, i32) {
    %c0_i32 = arith.constant 0 : i32
    %c0_i32_0 = arith.constant 0 : i32
    %c0_i32_1 = arith.constant 0 : i32
    %c0_i32_2 = arith.constant 0 : i32
    return %c0_i32, %c0_i32_0, %c0_i32_1 : i32, i32, i32
  }
  func.func @transform_3(%arg0: i32) -> (i32, i32) {
    %c0_i32 = arith.constant 0 : i32
    %c0_i32_0 = arith.constant 0 : i32
    %c0_i32_1 = arith.constant 0 : i32
    return %c0_i32, %c0_i32_0 : i32, i32
  }
  func.func @transform_4(%arg0: i32) -> (i32, i32) {
    %c0_i32 = arith.constant 0 : i32
    %c0_i32_0 = arith.constant 0 : i32
    %c0_i32_1 = arith.constant 0 : i32
    return %c0_i32, %c0_i32_0 : i32, i32
  }
  func.func @transform_5(%arg0: i32) -> (i32, i32, i32) {
    %c0_i32 = arith.constant 0 : i32
    %c0_i32_0 = arith.constant 0 : i32
    %c0_i32_1 = arith.constant 0 : i32
    %c0_i32_2 = arith.constant 0 : i32
    return %c0_i32, %c0_i32_0, %c0_i32_1 : i32, i32, i32
  }
  func.func @transform_6(%arg0: i32) -> (i32, i32) {
    %c0_i32 = arith.constant 0 : i32
    %c0_i32_0 = arith.constant 0 : i32
    %c0_i32_1 = arith.constant 0 : i32
    return %c0_i32, %c0_i32_0 : i32, i32
  }
  func.func @transform_7(%arg0: i32) -> (i32, i32, i32) {
    %c0_i32 = arith.constant 0 : i32
    %c0_i32_0 = arith.constant 0 : i32
    %c0_i32_1 = arith.constant 0 : i32
    %c0_i32_2 = arith.constant 0 : i32
    return %c0_i32, %c0_i32_0, %c0_i32_1 : i32, i32, i32
  }
  func.func @transform_8(%arg0: i32) -> (i32, i32, i32) {
    %c0_i32 = arith.constant 0 : i32
    %c0_i32_0 = arith.constant 0 : i32
    %c0_i32_1 = arith.constant 0 : i32
    %c0_i32_2 = arith.constant 0 : i32
    return %c0_i32, %c0_i32_0, %c0_i32_1 : i32, i32, i32
  }
  func.func @transform_9(%arg0: i32) -> (i32, i32) {
    %c0_i32 = arith.constant 0 : i32
    %c0_i32_0 = arith.constant 0 : i32
    %c0_i32_1 = arith.constant 0 : i32
    return %c0_i32, %c0_i32_0 : i32, i32
  }
  func.func @transform_10(%arg0: i32) -> (i32, i32) {
    %c0_i32 = arith.constant 0 : i32
    %c0_i32_0 = arith.constant 0 : i32
    %c0_i32_1 = arith.constant 0 : i32
    return %c0_i32, %c0_i32_0 : i32, i32
  }
  func.func @transform_11(%arg0: i32) -> (i32, i32, i32) {
    %c0_i32 = arith.constant 0 : i32
    %c0_i32_0 = arith.constant 0 : i32
    %c0_i32_1 = arith.constant 0 : i32
    return %arg0, %c0_i32, %c0_i32_0 : i32, i32, i32
  }
  func.func @transform_12(%arg0: i32) -> (i32, i32, i32) {
    %c0_i32 = arith.constant 0 : i32
    %c0_i32_0 = arith.constant 0 : i32
    %c0_i32_1 = arith.constant 0 : i32
    return %arg0, %c0_i32, %c0_i32_0 : i32, i32, i32
  }
}

</mosaic_0001>

<llo_original>
// kernel: vae_forward.1
$region0: #{vae_forward.1}
  #allocation0 [shape = 'u32[]', space=smem, size = 0x4, offset = 0x4, fixed_abs, tag = 'smem constant byte address 0x4 - core index']
  #allocation1 [shape = 'u32[72,128]{1,0:T(1,128)}', space=vmem, size = 0x9000, scoped, tag = 'internal scratch']
  %s0 = inlined_call_operand.vmem [shape: f32[2,4,256], index: 0, kind: input, shape index: {}]
  %s1 = inlined_call_operand.vmem [shape: f32[2,1,32], index: 1, kind: input, shape index: {}]
  %s2 = inlined_call_operand.vmem [shape: f32[9,1,256], index: 2, kind: input, shape index: {}]
  %s3 = inlined_call_operand.vmem [shape: f32[8,36], index: 3, kind: input, shape index: {}]
  %s4 = inlined_call_operand.vmem [shape: f32[8,1], index: 4, kind: input, shape index: {}]
  %s5 = inlined_call_operand.vmem [shape: bf16[8,256,64], index: 5, kind: input, shape index: {}]
  %s6 = inlined_call_operand.vmem [shape: f32[1,64], index: 6, kind: input, shape index: {}]
  %s7 = inlined_call_operand.vmem [shape: bf16[8,32,256], index: 7, kind: input, shape index: {}]
  %s8 = inlined_call_operand.vmem [shape: f32[8,1,256], index: 8, kind: input, shape index: {}]
  %s9 = inlined_call_operand.vmem [shape: f32[4,72], index: 9, kind: input, shape index: {}]
  %s10 = inlined_call_operand.vmem [shape: f32[4,1], index: 10, kind: input, shape index: {}]
  %s11 = inlined_call_operand.vmem [shape: f32[2,4,256], index: 11, kind: output, shape index: {0}]
  %s12 = inlined_call_operand.vmem [shape: f32[2,1,64], index: 12, kind: output, shape index: {1}]
  %13 = xla_tuple %s11, %s12
  %s14 = sld [smem:[#allocation0]]
  $region85: #{vae_forward.1} parent=0
    _
  %s16 = ssub.s32 1, %s14
  %s17 = scalar_select 0, %s16, %s14
  loop: start=0, step=1, limit=4
  $region2: #{vae_forward.1} parent=0 // loop_pre_header
    _
  $region3: #{vae_forward.1} parent=0 // loop_header
    %s19 = sphi 0, %s23
    %p20 = scmp.ge.s32.totalorder %s19, 4
    %s29 = sphi 0, %s31
    %s32 = sphi 0, %s29
    %s33 = sphi 0, %s32
    %s49 = sphi 0, %s33
    %s55 = sphi 0, %s57
    %s58 = sphi 0, %s55
    %s59 = sphi 0, %s58
    %s75 = sphi 0, %s59
    %s79 = sphi 0, %s79
    %s81 = sphi 0, %s79
    %s82 = sphi 0, %s81
    %s96 = sphi 0, %s82
    %s100 = sphi 0, %s100
    %s102 = sphi 0, %s100
    %s103 = sphi 0, %s102
    %s117 = sphi 0, %s103
    %s121 = sphi 0, %s121
    %s123 = sphi 0, %s121
    %s124 = sphi 0, %s123
    %s138 = sphi 0, %s124
    %s142 = sphi 0, %s142
    %s144 = sphi 0, %s142
    %s145 = sphi 0, %s144
    %s159 = sphi 0, %s145
    %s163 = sphi 0, %s163
    %s165 = sphi 0, %s163
    %s166 = sphi 0, %s165
    %s180 = sphi 0, %s166
    %s184 = sphi 0, %s184
    %s186 = sphi 0, %s184
    %s187 = sphi 0, %s186
    %s201 = sphi 0, %s187
    %s205 = sphi 0, %s205
    %s207 = sphi 0, %s205
    %s208 = sphi 0, %s207
    %s222 = sphi 0, %s208
    %s226 = sphi 0, %s226
    %s228 = sphi 0, %s226
    %s229 = sphi 0, %s228
    %s243 = sphi 0, %s229
    %s247 = sphi 0, %s247
    %s249 = sphi 0, %s247
    %s250 = sphi 0, %s249
    %s264 = sphi 0, %s250
    %s270 = sphi 0, %s272
    %s273 = sphi 0, %s270
    %s274 = sphi 0, %s273
    %s290 = sphi 0, %s274
    %s296 = sphi 0, %s298
    %s299 = sphi 0, %s296
    %s300 = sphi 0, %s299
    %s316 = sphi 0, %s300
  $region4: #{vae_forward.1} parent=0 // loop_header_branch
    %22 = sbr.rel (%p20) target = $region8
  $region5: #{vae_forward.1} parent=0 // loop_body
    %s24 = ssub.s32 %s19, 1
    %s25 = ssub.s32 %s19, 2
    %s26 = sadd.s32 %s19, 1
    %s27 = ssub.s32 %s19, %s26
    %p28 = scmp.eq.s32.totalorder %s27, 0
    %s30 = sadd.s32 %s29, 1
    %s31 = scalar_select %p28, %s29, %s30
    %p34 = pneg %p28
    %p35 = scmp.eq.s32.totalorder %s19, 1
    %p36 = por %p34, %p35
    %p37 = scmp.ne.s32.totalorder %s29, %s32
    %p38 = scmp.eq.s32.totalorder %s19, 0
    %p39 = por %p37, %p38
    %p40 = scmp.ne.s32.totalorder %s29, %s32
    %p41 = scmp.eq.s32.totalorder %s24, 1
    %p42 = por %p40, %p41
    %p43 = scmp.ne.s32.totalorder %s32, %s33
    %p44 = scmp.eq.s32.totalorder %s24, 0
    %p45 = por %p43, %p44
    %p46 = scmp.ne.s32.totalorder %s32, %s33
    %p47 = scmp.eq.s32.totalorder %s25, 1
    %p48 = por %p46, %p47
    %p50 = scmp.ne.s32.totalorder %s33, %s49
    %p51 = scmp.eq.s32.totalorder %s25, 0
    %p52 = por %p50, %p51
    %s53 = ssub.s32 %s19, %s26
    %p54 = scmp.eq.s32.totalorder %s53, 0
    %s56 = sadd.s32 %s55, 1
    %s57 = scalar_select %p54, %s55, %s56
    %p60 = pneg %p54
    %p61 = scmp.eq.s32.totalorder %s19, 1
    %p62 = por %p60, %p61
    %p63 = scmp.ne.s32.totalorder %s55, %s58
    %p64 = scmp.eq.s32.totalorder %s19, 0
    %p65 = por %p63, %p64
    %p66 = scmp.ne.s32.totalorder %s55, %s58
    %p67 = scmp.eq.s32.totalorder %s24, 1
    %p68 = por %p66, %p67
    %p69 = scmp.ne.s32.totalorder %s58, %s59
    %p70 = scmp.eq.s32.totalorder %s24, 0
    %p71 = por %p69, %p70
    %p72 = scmp.ne.s32.totalorder %s58, %s59
    %p73 = scmp.eq.s32.totalorder %s25, 1
    %p74 = por %p72, %p73
    %p76 = scmp.ne.s32.totalorder %s59, %s75
    %p77 = scmp.eq.s32.totalorder %s25, 0
    %p78 = por %p76, %p77
    %s80 = sadd.s32 %s79, 1
    %p83 = scmp.eq.s32.totalorder %s19, 1
    %p84 = scmp.ne.s32.totalorder %s79, %s81
    %p85 = scmp.eq.s32.totalorder %s19, 0
    %p86 = por %p84, %p85
    %p87 = scmp.ne.s32.totalorder %s79, %s81
    %p88 = scmp.eq.s32.totalorder %s24, 1
    %p89 = por %p87, %p88
    %p90 = scmp.ne.s32.totalorder %s81, %s82
    %p91 = scmp.eq.s32.totalorder %s24, 0
    %p92 = por %p90, %p91
    %p93 = scmp.ne.s32.totalorder %s81, %s82
    %p94 = scmp.eq.s32.totalorder %s25, 1
    %p95 = por %p93, %p94
    %p97 = scmp.ne.s32.totalorder %s82, %s96
    %p98 = scmp.eq.s32.totalorder %s25, 0
    %p99 = por %p97, %p98
    %s101 = sadd.s32 %s100, 1
    %p104 = scmp.eq.s32.totalorder %s19, 1
    %p105 = scmp.ne.s32.totalorder %s100, %s102
    %p106 = scmp.eq.s32.totalorder %s19, 0
    %p107 = por %p105, %p106
    %p108 = scmp.ne.s32.totalorder %s100, %s102
    %p109 = scmp.eq.s32.totalorder %s24, 1
    %p110 = por %p108, %p109
    %p111 = scmp.ne.s32.totalorder %s102, %s103
    %p112 = scmp.eq.s32.totalorder %s24, 0
    %p113 = por %p111, %p112
    %p114 = scmp.ne.s32.totalorder %s102, %s103
    %p115 = scmp.eq.s32.totalorder %s25, 1
    %p116 = por %p114, %p115
    %p118 = scmp.ne.s32.totalorder %s103, %s117
    %p119 = scmp.eq.s32.totalorder %s25, 0
    %p120 = por %p118, %p119
    %s122 = sadd.s32 %s121, 1
    %p125 = scmp.eq.s32.totalorder %s19, 1
    %p126 = scmp.ne.s32.totalorder %s121, %s123
    %p127 = scmp.eq.s32.totalorder %s19, 0
    %p128 = por %p126, %p127
    %p129 = scmp.ne.s32.totalorder %s121, %s123
    %p130 = scmp.eq.s32.totalorder %s24, 1
    %p131 = por %p129, %p130
    %p132 = scmp.ne.s32.totalorder %s123, %s124
    %p133 = scmp.eq.s32.totalorder %s24, 0
    %p134 = por %p132, %p133
    %p135 = scmp.ne.s32.totalorder %s123, %s124
    %p136 = scmp.eq.s32.totalorder %s25, 1
    %p137 = por %p135, %p136
    %p139 = scmp.ne.s32.totalorder %s124, %s138
    %p140 = scmp.eq.s32.totalorder %s25, 0
    %p141 = por %p139, %p140
    %s143 = sadd.s32 %s142, 1
    %p146 = scmp.eq.s32.totalorder %s19, 1
    %p147 = scmp.ne.s32.totalorder %s142, %s144
    %p148 = scmp.eq.s32.totalorder %s19, 0
    %p149 = por %p147, %p148
    %p150 = scmp.ne.s32.totalorder %s142, %s144
    %p151 = scmp.eq.s32.totalorder %s24, 1
    %p152 = por %p150, %p151
    %p153 = scmp.ne.s32.totalorder %s144, %s145
    %p154 = scmp.eq.s32.totalorder %s24, 0
    %p155 = por %p153, %p154
    %p156 = scmp.ne.s32.totalorder %s144, %s145
    %p157 = scmp.eq.s32.totalorder %s25, 1
    %p158 = por %p156, %p157
    %p160 = scmp.ne.s32.totalorder %s145, %s159
    %p161 = scmp.eq.s32.totalorder %s25, 0
    %p162 = por %p160, %p161
    %s164 = sadd.s32 %s163, 1
    %p167 = scmp.eq.s32.totalorder %s19, 1
    %p168 = scmp.ne.s32.totalorder %s163, %s165
    %p169 = scmp.eq.s32.totalorder %s19, 0
    %p170 = por %p168, %p169
    %p171 = scmp.ne.s32.totalorder %s163, %s165
    %p172 = scmp.eq.s32.totalorder %s24, 1
    %p173 = por %p171, %p172
    %p174 = scmp.ne.s32.totalorder %s165, %s166
    %p175 = scmp.eq.s32.totalorder %s24, 0
    %p176 = por %p174, %p175
    %p177 = scmp.ne.s32.totalorder %s165, %s166
    %p178 = scmp.eq.s32.totalorder %s25, 1
    %p179 = por %p177, %p178
    %p181 = scmp.ne.s32.totalorder %s166, %s180
    %p182 = scmp.eq.s32.totalorder %s25, 0
    %p183 = por %p181, %p182
    %s185 = sadd.s32 %s184, 1
    %p188 = scmp.eq.s32.totalorder %s19, 1
    %p189 = scmp.ne.s32.totalorder %s184, %s186
    %p190 = scmp.eq.s32.totalorder %s19, 0
    %p191 = por %p189, %p190
    %p192 = scmp.ne.s32.totalorder %s184, %s186
    %p193 = scmp.eq.s32.totalorder %s24, 1
    %p194 = por %p192, %p193
    %p195 = scmp.ne.s32.totalorder %s186, %s187
    %p196 = scmp.eq.s32.totalorder %s24, 0
    %p197 = por %p195, %p196
    %p198 = scmp.ne.s32.totalorder %s186, %s187
    %p199 = scmp.eq.s32.totalorder %s25, 1
    %p200 = por %p198, %p199
    %p202 = scmp.ne.s32.totalorder %s187, %s201
    %p203 = scmp.eq.s32.totalorder %s25, 0
    %p204 = por %p202, %p203
    %s206 = sadd.s32 %s205, 1
    %p209 = scmp.eq.s32.totalorder %s19, 1
    %p210 = scmp.ne.s32.totalorder %s205, %s207
    %p211 = scmp.eq.s32.totalorder %s19, 0
    %p212 = por %p210, %p211
    %p213 = scmp.ne.s32.totalorder %s205, %s207
    %p214 = scmp.eq.s32.totalorder %s24, 1
    %p215 = por %p213, %p214
    %p216 = scmp.ne.s32.totalorder %s207, %s208
    %p217 = scmp.eq.s32.totalorder %s24, 0
    %p218 = por %p216, %p217
    %p219 = scmp.ne.s32.totalorder %s207, %s208
    %p220 = scmp.eq.s32.totalorder %s25, 1
    %p221 = por %p219, %p220
    %p223 = scmp.ne.s32.totalorder %s208, %s222
    %p224 = scmp.eq.s32.totalorder %s25, 0
    %p225 = por %p223, %p224
    %s227 = sadd.s32 %s226, 1
    %p230 = scmp.eq.s32.totalorder %s19, 1
    %p231 = scmp.ne.s32.totalorder %s226, %s228
    %p232 = scmp.eq.s32.totalorder %s19, 0
    %p233 = por %p231, %p232
    %p234 = scmp.ne.s32.totalorder %s226, %s228
    %p235 = scmp.eq.s32.totalorder %s24, 1
    %p236 = por %p234, %p235
    %p237 = scmp.ne.s32.totalorder %s228, %s229
    %p238 = scmp.eq.s32.totalorder %s24, 0
    %p239 = por %p237, %p238
    %p240 = scmp.ne.s32.totalorder %s228, %s229
    %p241 = scmp.eq.s32.totalorder %s25, 1
    %p242 = por %p240, %p241
    %p244 = scmp.ne.s32.totalorder %s229, %s243
    %p245 = scmp.eq.s32.totalorder %s25, 0
    %p246 = por %p244, %p245
    %s248 = sadd.s32 %s247, 1
    %p251 = scmp.eq.s32.totalorder %s19, 1
    %p252 = scmp.ne.s32.totalorder %s247, %s249
    %p253 = scmp.eq.s32.totalorder %s19, 0
    %p254 = por %p252, %p253
    %p255 = scmp.ne.s32.totalorder %s247, %s249
    %p256 = scmp.eq.s32.totalorder %s24, 1
    %p257 = por %p255, %p256
    %p258 = scmp.ne.s32.totalorder %s249, %s250
    %p259 = scmp.eq.s32.totalorder %s24, 0
    %p260 = por %p258, %p259
    %p261 = scmp.ne.s32.totalorder %s249, %s250
    %p262 = scmp.eq.s32.totalorder %s25, 1
    %p263 = por %p261, %p262
    %p265 = scmp.ne.s32.totalorder %s250, %s264
    %p266 = scmp.eq.s32.totalorder %s25, 0
    %p267 = por %p265, %p266
    %s268 = ssub.s32 %s19, %s26
    %p269 = scmp.eq.s32.totalorder %s268, 0
    %s271 = sadd.s32 %s270, 1
    %s272 = scalar_select %p269, %s270, %s271
    %p275 = pneg %p269
    %p276 = scmp.eq.s32.totalorder %s19, 1
    %p277 = por %p275, %p276
    %p278 = scmp.ne.s32.totalorder %s270, %s273
    %p279 = scmp.eq.s32.totalorder %s19, 0
    %p280 = por %p278, %p279
    %p281 = scmp.ne.s32.totalorder %s270, %s273
    %p282 = scmp.eq.s32.totalorder %s24, 1
    %p283 = por %p281, %p282
    %p284 = scmp.ne.s32.totalorder %s273, %s274
    %p285 = scmp.eq.s32.totalorder %s24, 0
    %p286 = por %p284, %p285
    %p287 = scmp.ne.s32.totalorder %s273, %s274
    %p288 = scmp.eq.s32.totalorder %s25, 1
    %p289 = por %p287, %p288
    %p291 = scmp.ne.s32.totalorder %s274, %s290
    %p292 = scmp.eq.s32.totalorder %s25, 0
    %p293 = por %p291, %p292
    %s294 = ssub.s32 %s19, %s26
    %p295 = scmp.eq.s32.totalorder %s294, 0
    %s297 = sadd.s32 %s296, 1
    %s298 = scalar_select %p295, %s296, %s297
    %p301 = pneg %p295
    %p302 = scmp.eq.s32.totalorder %s19, 1
    %p303 = por %p301, %p302
    %p304 = scmp.ne.s32.totalorder %s296, %s299
    %p305 = scmp.eq.s32.totalorder %s19, 0
    %p306 = por %p304, %p305
    %p307 = scmp.ne.s32.totalorder %s296, %s299
    %p308 = scmp.eq.s32.totalorder %s24, 1
    %p309 = por %p307, %p308
    %p310 = scmp.ne.s32.totalorder %s299, %s300
    %p311 = scmp.eq.s32.totalorder %s24, 0
    %p312 = por %p310, %p311
    %p313 = scmp.ne.s32.totalorder %s299, %s300
    %p314 = scmp.eq.s32.totalorder %s25, 1
    %p315 = por %p313, %p314
    %p317 = scmp.ne.s32.totalorder %s300, %s316
    %p318 = scmp.eq.s32.totalorder %s25, 0
    %p319 = por %p317, %p318
    %p320 = scmp.le.s32.totalorder 1, %s19
    %p321 = scmp.lt.s32.totalorder %s19, 3
    %p322 = pnand %p320, %p321
    %p323 = pneg %p322
    // Predicated region
    $region9: #{vae_forward.1} parent=5 // pred_check
      _
    $region10: #{vae_forward.1} parent=5 // pred_check_branch
      %325 = sbr.rel (%p322) target = $region12
    $region11: #{vae_forward.1} parent=5 // pred_region
      %s326 = ssub.s32 %s19, 1
      // Predicated region
      $region13: #{vae_forward.1} parent=11 // pred_check
        %p327 = pneg %p92
      $region14: #{vae_forward.1} parent=11 // pred_check_branch
        %329 = sbr.rel (%p327) target = $region16
      $region15: #{vae_forward.1} parent=11 // pred_region
        _
      $region16: #{vae_forward.1} parent=11 // pred_fallthru
        _
      // Predicated region
      $region17: #{vae_forward.1} parent=11 // pred_check
        %p330 = pneg %p113
      $region18: #{vae_forward.1} parent=11 // pred_check_branch
        %332 = sbr.rel (%p330) target = $region20
      $region19: #{vae_forward.1} parent=11 // pred_region
        _
      $region20: #{vae_forward.1} parent=11 // pred_fallthru
        _
      // Predicated region
      $region21: #{vae_forward.1} parent=11 // pred_check
        %p333 = pneg %p134
      $region22: #{vae_forward.1} parent=11 // pred_check_branch
        %335 = sbr.rel (%p333) target = $region24
      $region23: #{vae_forward.1} parent=11 // pred_region
        _
      $region24: #{vae_forward.1} parent=11 // pred_fallthru
        _
      // Predicated region
      $region25: #{vae_forward.1} parent=11 // pred_check
        %p336 = pneg %p155
      $region26: #{vae_forward.1} parent=11 // pred_check_branch
        %338 = sbr.rel (%p336) target = $region28
      $region27: #{vae_forward.1} parent=11 // pred_region
        _
      $region28: #{vae_forward.1} parent=11 // pred_fallthru
        _
      // Predicated region
      $region29: #{vae_forward.1} parent=11 // pred_check
        %p339 = pneg %p176
      $region30: #{vae_forward.1} parent=11 // pred_check_branch
        %341 = sbr.rel (%p339) target = $region32
      $region31: #{vae_forward.1} parent=11 // pred_region
        _
      $region32: #{vae_forward.1} parent=11 // pred_fallthru
        _
      // Predicated region
      $region33: #{vae_forward.1} parent=11 // pred_check
        %p342 = pneg %p197
      $region34: #{vae_forward.1} parent=11 // pred_check_branch
        %344 = sbr.rel (%p342) target = $region36
      $region35: #{vae_forward.1} parent=11 // pred_region
        _
      $region36: #{vae_forward.1} parent=11 // pred_fallthru
        _
      // Predicated region
      $region37: #{vae_forward.1} parent=11 // pred_check
        %p345 = pneg %p218
      $region38: #{vae_forward.1} parent=11 // pred_check_branch
        %347 = sbr.rel (%p345) target = $region40
      $region39: #{vae_forward.1} parent=11 // pred_region
        _
      $region40: #{vae_forward.1} parent=11 // pred_fallthru
        _
      // Predicated region
      $region41: #{vae_forward.1} parent=11 // pred_check
        %p348 = pneg %p239
      $region42: #{vae_forward.1} parent=11 // pred_check_branch
        %350 = sbr.rel (%p348) target = $region44
      $region43: #{vae_forward.1} parent=11 // pred_region
        _
      $region44: #{vae_forward.1} parent=11 // pred_fallthru
        _
      // Predicated region
      $region45: #{vae_forward.1} parent=11 // pred_check
        %p351 = pneg %p260
      $region46: #{vae_forward.1} parent=11 // pred_check_branch
        %353 = sbr.rel (%p351) target = $region48
      $region47: #{vae_forward.1} parent=11 // pred_region
        _
      $region48: #{vae_forward.1} parent=11 // pred_fallthru
        _
    $region12: #{vae_forward.1} parent=5 // pred_fallthru
      _
    %p354 = scmp.lt.s32.totalorder %s19, 2
    // Predicated region
    $region49: #{vae_forward.1} parent=5 // pred_check
      %p355 = pneg %p354
    $region50: #{vae_forward.1} parent=5 // pred_check_branch
      %357 = sbr.rel (%p355) target = $region52
    $region51: #{vae_forward.1} parent=5 // pred_region
      // Predicated region
      $region53: #{vae_forward.1} parent=51 // pred_check
        %p358 = pneg %p39
      $region54: #{vae_forward.1} parent=51 // pred_check_branch
        %360 = sbr.rel (%p358) target = $region56
      $region55: #{vae_forward.1} parent=51 // pred_region
        %p361 = scmp.lt.s32.totalorder %s19, 1
        %s362 = scalar_select %p361, %s19, 1
        %s363 = smul.addr %s362, 2
        %s364 = smul.addr %s363, 4
        %s365 = scalar_lea.vmem %s0, %s364
      $region56: #{vae_forward.1} parent=51 // pred_fallthru
        _
      // Predicated region
      $region57: #{vae_forward.1} parent=51 // pred_check
        %p366 = pneg %p65
      $region58: #{vae_forward.1} parent=51 // pred_check_branch
        %368 = sbr.rel (%p366) target = $region60
      $region59: #{vae_forward.1} parent=51 // pred_region
        %p369 = scmp.lt.s32.totalorder %s19, 1
        %s370 = scalar_select %p369, %s19, 1
        %s371 = scalar_lea.vmem %s1, %s370
      $region60: #{vae_forward.1} parent=51 // pred_fallthru
        _
    $region52: #{vae_forward.1} parent=5 // pred_fallthru
      _
    %p372 = scmp.le.s32.totalorder 1, %s19
    %p373 = scmp.lt.s32.totalorder %s19, 3
    %p374 = pnand %p372, %p373
    %p375 = pneg %p374
    // Predicated region
    $region61: #{vae_forward.1} parent=5 // pred_check
      _
    $region62: #{vae_forward.1} parent=5 // pred_check_branch
      %377 = sbr.rel (%p374) target = $region64
    $region63: #{vae_forward.1} parent=5 // pred_region
      %s378 = ssub.s32 %s19, 1
      %p379 = scmp.lt.s32.totalorder %s24, 1
      %s380 = scalar_select %p379, %s24, 1
      %s381 = smul.addr %s380, 2
      %s382 = smul.addr %s381, 4
      %s383 = scalar_lea.vmem %s0, %s382
      %p384 = pneg %p45
      %p385 = pneg %p42
      %p386 = scmp.lt.s32.totalorder %s24, 1
      %s387 = scalar_select %p386, %s24, 1
      %s388 = scalar_lea.vmem %s1, %s387
      %p389 = pneg %p71
      %p390 = pneg %p68
      %p391 = pneg %p92
      %p392 = pneg %p89
      %p393 = pneg %p113
      %p394 = pneg %p110
      %p395 = pneg %p134
      %p396 = pneg %p131
      %p397 = pneg %p155
      %p398 = pneg %p152
      %p399 = pneg %p176
      %p400 = pneg %p173
      %p401 = pneg %p197
      %p402 = pneg %p194
      %p403 = pneg %p218
      %p404 = pneg %p215
      %p405 = pneg %p239
      %p406 = pneg %p236
      %p407 = pneg %p260
      %p408 = pneg %p257
      %p409 = pneg %p286
      %p410 = pneg %p283
      %p411 = scmp.lt.s32.totalorder %s24, 1
      %s412 = scalar_select %p411, %s24, 1
      %s413 = smul.addr %s412, 2
      %s414 = smul.addr %s413, 4
      %s415 = scalar_lea.vmem %s11, %s414
      %p416 = pneg %p312
      %p417 = pneg %p309
      %p418 = scmp.lt.s32.totalorder %s24, 1
      %s419 = scalar_select %p418, %s24, 1
      %s420 = scalar_lea.vmem %s12, %s419
      %p421 = scmp.lt.s32.totalorder %s24, 1
      %s422 = scalar_select %p421, %s24, 1
      %s423 = smul.addr %s422, 2
      %s424 = smul.addr %s423, 4
      %s425 = scalar_lea.vmem %s0, %s424
      %p426 = scmp.lt.s32.totalorder %s24, 1
      %s427 = scalar_select %p426, %s24, 1
      %s428 = scalar_lea.vmem %s1, %s427
      %p429 = scmp.lt.s32.totalorder %s24, 1
      %s430 = scalar_select %p429, %s24, 1
      %s431 = smul.addr %s430, 2
      %s432 = smul.addr %s431, 4
      %s433 = scalar_lea.vmem %s11, %s432
      %p434 = scmp.lt.s32.totalorder %s24, 1
      %s435 = scalar_select %p434, %s24, 1
      %s436 = scalar_lea.vmem %s12, %s435
      %v438 = vld [vmem:[%s2] sm:$0x3]
      %v439 = vld [vmem:[%s2 + $0x2] sm:$0x3]
      %v440 = vld [vmem:[%s2 + $0x4] sm:$0x3]
      %v441 = vld [vmem:[%s2 + $0x6] sm:$0x3]
      %v442 = vld [vmem:[%s2 + $0xa] sm:$0x3]
      %v443 = vld [vmem:[%s2 + $0xc] sm:$0x3]
      %v444 = vld [vmem:[%s2 + $0xe] sm:$0x3]
      %v445 = vld [vmem:[%s2 + $0x10] sm:$0x3]
      %v446 = vld [vmem:[%s3] sm:$0xff]
      %v447 = vld [vmem:[%s4] sm:$0xff]
      %v448 = vld [vmem:[%s425] sm:$0xff]
      %450 = vst [vmem:[#allocation1] ss:$2 sm:$0xff] %v448
      %v451 = vld.sshfl [vmem:[#allocation1] sm:$0xff pattern:$0x75316420]
      %v452 = vld.sshfl [vmem:[#allocation1 + $0x8] sm:$0xff pattern:$0x75316420]
      %455 = vrot.lane.b32.xlu0 %v451, 17
      %v456 = vpop.permute.xlu0 %455
      %457 = vrot.lane.b32.xlu0 %v452, 17
      %v458 = vpop.permute.xlu0 %457
      %v459 = vlaneseq
      %v460 = vand.u32 %v459, 127
      %vm461 = vcmp.lt.s32.totalorder %v460, 17
      %v462 = vsel %vm461, %v456, %v458
      %v463 = vsel %vm461, %v458, %v456
      %v465 = vperm.slane %v438, 0
      %v466 = vperm.slane %v438, 1
      %v469 = vmul.f32 %v463, %v465
      %v470 = vmul.f32 %v462, %v466
      %471 = vst [vmem:[#allocation1] ss:$2 sm:$0xff] %v448
      %v472 = vld.sshfl [vmem:[#allocation1] sm:$0xff pattern:$0x75316420]
      %v473 = vld.sshfl [vmem:[#allocation1 + $0x8] sm:$0xff pattern:$0x75316420]
      %476 = vrot.lane.b32.xlu0 %v472, 16
      %v477 = vpop.permute.xlu0 %476
      %478 = vrot.lane.b32.xlu0 %v473, 16
      %v479 = vpop.permute.xlu0 %478
      %vm480 = vcmp.lt.s32.totalorder %v460, 16
      %v481 = vsel %vm480, %v477, %v479
      %v482 = vsel %vm480, %v479, %v477
      %v484 = vperm.slane %v439, 0
      %v485 = vperm.slane %v439, 1
      %v488 = vmul.f32 %v482, %v484
      %v489 = vmul.f32 %v481, %v485
      %490 = vst [vmem:[#allocation1] ss:$2 sm:$0xff] %v448
      %v491 = vld.sshfl [vmem:[#allocation1] sm:$0xff pattern:$0x75316420]
      %v492 = vld.sshfl [vmem:[#allocation1 + $0x8] sm:$0xff pattern:$0x75316420]
      %495 = vrot.lane.b32.xlu0 %v491, 15
      %v496 = vpop.permute.xlu0 %495
      %497 = vrot.lane.b32.xlu0 %v492, 15
      %v498 = vpop.permute.xlu0 %497
      %vm499 = vcmp.lt.s32.totalorder %v460, 15
      %v500 = vsel %vm499, %v496, %v498
      %v501 = vsel %vm499, %v498, %v496
      %v503 = vperm.slane %v440, 0
      %v504 = vperm.slane %v440, 1
      %v507 = vmul.f32 %v501, %v503
      %v508 = vmul.f32 %v500, %v504
      %509 = vst [vmem:[#allocation1] ss:$2 sm:$0xff] %v448
      %v510 = vld.sshfl [vmem:[#allocation1] sm:$0xff pattern:$0x75316420]
      %v511 = vld.sshfl [vmem:[#allocation1 + $0x8] sm:$0xff pattern:$0x75316420]
      %514 = vrot.lane.b32.xlu0 %v510, 1
      %v515 = vpop.permute.xlu0 %514
      %516 = vrot.lane.b32.xlu0 %v511, 1
      %v517 = vpop.permute.xlu0 %516
      %vm518 = vcmp.lt.s32.totalorder %v460, 1
      %v519 = vsel %vm518, %v515, %v517
      %v520 = vsel %vm518, %v517, %v515
      %v522 = vperm.slane %v441, 0
      %v523 = vperm.slane %v441, 1
      %v526 = vmul.f32 %v520, %v522
      %v527 = vmul.f32 %v519, %v523
      %528 = vst [vmem:[#allocation1] ss:$2 sm:$0xff] %v448
      %v529 = vld.sshfl [vmem:[#allocation1] sm:$0xff pattern:$0x75316420]
      %v530 = vld.sshfl [vmem:[#allocation1 + $0x8] sm:$0xff pattern:$0x75316420]
      %533 = vrot.lane.b32.xlu0 %v529, 127
      %v534 = vpop.permute.xlu0 %533
      %535 = vrot.lane.b32.xlu0 %v530, 127
      %v536 = vpop.permute.xlu0 %535
      %vm537 = vcmp.lt.s32.totalorder %v460, 127
      %v538 = vsel %vm537, %v534, %v536
      %v539 = vsel %vm537, %v536, %v534
      %v541 = vperm.slane %v442, 0
      %v542 = vperm.slane %v442, 1
      %v545 = vmul.f32 %v538, %v541
      %v546 = vmul.f32 %v539, %v542
      %547 = vst [vmem:[#allocation1] ss:$2 sm:$0xff] %v448
      %v548 = vld.sshfl [vmem:[#allocation1] sm:$0xff pattern:$0x75316420]
      %v549 = vld.sshfl [vmem:[#allocation1 + $0x8] sm:$0xff pattern:$0x75316420]
      %552 = vrot.lane.b32.xlu0 %v548, 113
      %v553 = vpop.permute.xlu0 %552
      %554 = vrot.lane.b32.xlu0 %v549, 113
      %v555 = vpop.permute.xlu0 %554
      %vm556 = vcmp.lt.s32.totalorder %v460, 113
      %v557 = vsel %vm556, %v553, %v555
      %v558 = vsel %vm556, %v555, %v553
      %v560 = vperm.slane %v443, 0
      %v561 = vperm.slane %v443, 1
      %v564 = vmul.f32 %v557, %v560
      %v565 = vmul.f32 %v558, %v561
      %566 = vst [vmem:[#allocation1] ss:$2 sm:$0xff] %v448
      %v567 = vld.sshfl [vmem:[#allocation1] sm:$0xff pattern:$0x75316420]
      %v568 = vld.sshfl [vmem:[#allocation1 + $0x8] sm:$0xff pattern:$0x75316420]
      %571 = vrot.lane.b32.xlu0 %v567, 112
      %v572 = vpop.permute.xlu0 %571
      %573 = vrot.lane.b32.xlu0 %v568, 112
      %v574 = vpop.permute.xlu0 %573
      %vm575 = vcmp.lt.s32.totalorder %v460, 112
      %v576 = vsel %vm575, %v572, %v574
      %v577 = vsel %vm575, %v574, %v572
      %v579 = vperm.slane %v444, 0
      %v580 = vperm.slane %v444, 1
      %v583 = vmul.f32 %v576, %v579
      %v584 = vmul.f32 %v577, %v580
      %585 = vst [vmem:[#allocation1] ss:$2 sm:$0xff] %v448
      %v586 = vld.sshfl [vmem:[#allocation1] sm:$0xff pattern:$0x75316420]
      %v587 = vld.sshfl [vmem:[#allocation1 + $0x8] sm:$0xff pattern:$0x75316420]
      %590 = vrot.lane.b32.xlu0 %v586, 111
      %v591 = vpop.permute.xlu0 %590
      %592 = vrot.lane.b32.xlu0 %v587, 111
      %v593 = vpop.permute.xlu0 %592
      %vm594 = vcmp.lt.s32.totalorder %v460, 111
      %v595 = vsel %vm594, %v591, %v593
      %v596 = vsel %vm594, %v593, %v591
      %v598 = vperm.slane %v445, 0
      %v599 = vperm.slane %v445, 1
      %v602 = vmul.f32 %v595, %v598
      %v603 = vmul.f32 %v596, %v599
      %v606 = vrot.slane %v488, 4
      %v607 = vrot.slane %v489, 4
      %v612 = vrot.slane %v526, 4
      %v613 = vrot.slane %v527, 4
      %616 = vst [vmem:[#allocation1] ss:$2 sm:$0xff] %v448
      %v617 = vld.sshfl [vmem:[#allocation1] sm:$0xff pattern:$0x75316420]
      %v618 = vld.sshfl [vmem:[#allocation1 + $0x8] sm:$0xff pattern:$0x75316420]
      %v623 = vrot.slane %v545, 4
      %v624 = vrot.slane %v546, 4
      %v629 = vrot.slane %v583, 4
      %v630 = vrot.slane %v584, 4
      %vm633 = vcmask 1043456
      %v634 = vsel %vm633, %v469, %v606
      %v635 = vsel %vm633, %v470, %v607
      %v636 = vsel %vm633, %v507, %v612
      %v637 = vsel %vm633, %v508, %v613
      %v638 = vsel %vm633, %v617, %v623
      %v639 = vsel %vm633, %v618, %v624
      %v640 = vsel %vm633, %v564, %v629
      %v641 = vsel %vm633, %v565, %v630
      %643 = vset.pattern.permute.xlu0 0
      %644 = vperm.xlu0 %643, %v447
      %v645 = vpop.permute.xlu0 %644
      %vm647 = vcmask 293888
      %v649 = vsel %vm647, %v446, 0
      %v652 = vsel %vm633, %v602, 0
      %v655 = vsel %vm633, %v603, 0
      %657 = vmatpush.msra.mxu0 0.0
      %658 = vmatpush.msra.mxu0 0.0
      %659 = vmatpush.msra.mxu0 0.0
      %660 = vmatpush.msra.mxu0 0.0
      %661 = vmatpush.msra.mxu0 0.0
      %662 = vmatpush.msra.mxu0 0.0
      %663 = vmatpush.msra.mxu0 0.0
      %664 = vmatpush.msra.mxu0 0.0
      %665 = vmatpush.msra.mxu0 0.0
      %666 = vmatpush.msra.mxu0 0.0
      %667 = vmatpush.msra.mxu0 0.0
      %668 = vmatpush.msra.mxu0 %v652
      %669 = vmatpush.msra.mxu0 %v640
      %670 = vmatpush.msra.mxu0 %v638
      %671 = vmatpush.msra.mxu0 %v636
      %672 = vmatpush.msra.mxu0 %v634
      %673 = vmatmul.f32.gmra.mxu0 %v649
      %v674 = vpop.f32.mrf.mxu0
      %v675 = vadd.f32 %v645, %v674
      %676 = vdwg.mxu0
      %677 = vmatpush.msra.mxu0 0.0
      %678 = vmatpush.msra.mxu0 0.0
      %679 = vmatpush.msra.mxu0 0.0
      %680 = vmatpush.msra.mxu0 0.0
      %681 = vmatpush.msra.mxu0 0.0
      %682 = vmatpush.msra.mxu0 0.0
      %683 = vmatpush.msra.mxu0 0.0
      %684 = vmatpush.msra.mxu0 0.0
      %685 = vmatpush.msra.mxu0 0.0
      %686 = vmatpush.msra.mxu0 0.0
      %687 = vmatpush.msra.mxu0 0.0
      %688 = vmatpush.msra.mxu0 %v655
      %689 = vmatpush.msra.mxu0 %v641
      %690 = vmatpush.msra.mxu0 %v639
      %691 = vmatpush.msra.mxu0 %v637
      %692 = vmatpush.msra.mxu0 %v635
      %693 = vmatmul.f32.gmra.mxu0 %v649
      %v694 = vpop.f32.mrf.mxu0
      %v695 = vadd.f32 %v645, %v694
      %696 = vdwg.mxu0
      %v697 = vmax.f32 %v675, 0.0
      %v698 = vmax.f32 %v695, 0.0
      %v699 = vpack.c.bf16 %v697, %v697
      %v700 = vpack.c.bf16 %v698, %v698
      %v701 = vld [vmem:[%s5] sm:$0xf]
      %v702 = vld [vmem:[%s5 + $0x4] sm:$0xf]
      %v703 = vld [vmem:[%s5 + $0x8] sm:$0xf]
      %v704 = vld [vmem:[%s5 + $0xc] sm:$0xf]
      %v705 = vld [vmem:[%s5 + $0x10] sm:$0xf]
      %v706 = vld [vmem:[%s5 + $0x14] sm:$0xf]
      %v707 = vld [vmem:[%s5 + $0x18] sm:$0xf]
      %v708 = vld [vmem:[%s5 + $0x1c] sm:$0xf]
      %v709 = vld [vmem:[%s5 + $0x20] sm:$0xf]
      %v710 = vld [vmem:[%s5 + $0x24] sm:$0xf]
      %v711 = vld [vmem:[%s5 + $0x28] sm:$0xf]
      %v712 = vld [vmem:[%s5 + $0x2c] sm:$0xf]
      %v713 = vld [vmem:[%s5 + $0x30] sm:$0xf]
      %v714 = vld [vmem:[%s5 + $0x34] sm:$0xf]
      %v715 = vld [vmem:[%s5 + $0x38] sm:$0xf]
      %v716 = vld [vmem:[%s5 + $0x3c] sm:$0xf]
      %v717 = vld [vmem:[%s5 + $0x40] sm:$0xf]
      %v718 = vld [vmem:[%s5 + $0x44] sm:$0xf]
      %v719 = vld [vmem:[%s5 + $0x48] sm:$0xf]
      %v720 = vld [vmem:[%s5 + $0x4c] sm:$0xf]
      %v721 = vld [vmem:[%s5 + $0x50] sm:$0xf]
      %v722 = vld [vmem:[%s5 + $0x54] sm:$0xf]
      %v723 = vld [vmem:[%s5 + $0x58] sm:$0xf]
      %v724 = vld [vmem:[%s5 + $0x5c] sm:$0xf]
      %v725 = vld [vmem:[%s5 + $0x60] sm:$0xf]
      %v726 = vld [vmem:[%s5 + $0x64] sm:$0xf]
      %v727 = vld [vmem:[%s5 + $0x68] sm:$0xf]
      %v728 = vld [vmem:[%s5 + $0x6c] sm:$0xf]
      %v729 = vld [vmem:[%s5 + $0x70] sm:$0xf]
      %v730 = vld [vmem:[%s5 + $0x74] sm:$0xf]
      %v731 = vld [vmem:[%s5 + $0x78] sm:$0xf]
      %v732 = vld [vmem:[%s5 + $0x7c] sm:$0xf]
      %s733 = scalar_lea.vmem %s5, 128
      %v734 = vld [vmem:[%s733] sm:$0xf]
      %v735 = vld [vmem:[%s733 + $0x4] sm:$0xf]
      %v736 = vld [vmem:[%s733 + $0x8] sm:$0xf]
      %v737 = vld [vmem:[%s733 + $0xc] sm:$0xf]
      %v738 = vld [vmem:[%s733 + $0x10] sm:$0xf]
      %v739 = vld [vmem:[%s733 + $0x14] sm:$0xf]
      %v740 = vld [vmem:[%s733 + $0x18] sm:$0xf]
      %v741 = vld [vmem:[%s733 + $0x1c] sm:$0xf]
      %v742 = vld [vmem:[%s733 + $0x20] sm:$0xf]
      %v743 = vld [vmem:[%s733 + $0x24] sm:$0xf]
      %v744 = vld [vmem:[%s733 + $0x28] sm:$0xf]
      %v745 = vld [vmem:[%s733 + $0x2c] sm:$0xf]
      %v746 = vld [vmem:[%s733 + $0x30] sm:$0xf]
      %v747 = vld [vmem:[%s733 + $0x34] sm:$0xf]
      %v748 = vld [vmem:[%s733 + $0x38] sm:$0xf]
      %v749 = vld [vmem:[%s733 + $0x3c] sm:$0xf]
      %v750 = vld [vmem:[%s733 + $0x40] sm:$0xf]
      %v751 = vld [vmem:[%s733 + $0x44] sm:$0xf]
      %v752 = vld [vmem:[%s733 + $0x48] sm:$0xf]
      %v753 = vld [vmem:[%s733 + $0x4c] sm:$0xf]
      %v754 = vld [vmem:[%s733 + $0x50] sm:$0xf]
      %v755 = vld [vmem:[%s733 + $0x54] sm:$0xf]
      %v756 = vld [vmem:[%s733 + $0x58] sm:$0xf]
      %v757 = vld [vmem:[%s733 + $0x5c] sm:$0xf]
      %v758 = vld [vmem:[%s733 + $0x60] sm:$0xf]
      %v759 = vld [vmem:[%s733 + $0x64] sm:$0xf]
      %v760 = vld [vmem:[%s733 + $0x68] sm:$0xf]
      %v761 = vld [vmem:[%s733 + $0x6c] sm:$0xf]
      %v762 = vld [vmem:[%s733 + $0x70] sm:$0xf]
      %v763 = vld [vmem:[%s733 + $0x74] sm:$0xf]
      %v764 = vld [vmem:[%s733 + $0x78] sm:$0xf]
      %v765 = vld [vmem:[%s733 + $0x7c] sm:$0xf]
      %v767 = vshrl.u32 %v699, 16
      %v770 = vshrl.u32 %v700, 16
      %v806 = vunpack.c.l.b16 %v734
      %v807 = vunpack.c.l.b16 %v735
      %v808 = vunpack.c.l.b16 %v736
      %v809 = vunpack.c.l.b16 %v737
      %v810 = vunpack.c.l.b16 %v738
      %v811 = vunpack.c.l.b16 %v739
      %v812 = vunpack.c.l.b16 %v740
      %v813 = vunpack.c.l.b16 %v741
      %v814 = vunpack.c.l.b16 %v742
      %v815 = vunpack.c.l.b16 %v743
      %v816 = vunpack.c.l.b16 %v744
      %v817 = vunpack.c.l.b16 %v745
      %v818 = vunpack.c.l.b16 %v746
      %v819 = vunpack.c.l.b16 %v747
      %v820 = vunpack.c.l.b16 %v748
      %v821 = vunpack.c.l.b16 %v749
      %v822 = vunpack.c.l.b16 %v750
      %v823 = vunpack.c.l.b16 %v751
      %v824 = vunpack.c.l.b16 %v752
      %v825 = vunpack.c.l.b16 %v753
      %v826 = vunpack.c.l.b16 %v754
      %v827 = vunpack.c.l.b16 %v755
      %v828 = vunpack.c.l.b16 %v756
      %v829 = vunpack.c.l.b16 %v757
      %v830 = vunpack.c.l.b16 %v758
      %v831 = vunpack.c.l.b16 %v759
      %v832 = vunpack.c.l.b16 %v760
      %v833 = vunpack.c.l.b16 %v761
      %v834 = vunpack.c.l.b16 %v762
      %v835 = vunpack.c.l.b16 %v763
      %v836 = vunpack.c.l.b16 %v764
      %v837 = vunpack.c.l.b16 %v765
      %v838 = vpack.c.b16 %v807, %v806
      %v839 = vpack.c.b16 %v809, %v808
      %v840 = vpack.c.b16 %v811, %v810
      %v841 = vpack.c.b16 %v813, %v812
      %v842 = vpack.c.b16 %v815, %v814
      %v843 = vpack.c.b16 %v817, %v816
      %v844 = vpack.c.b16 %v819, %v818
      %v845 = vpack.c.b16 %v821, %v820
      %v846 = vpack.c.b16 %v823, %v822
      %v847 = vpack.c.b16 %v825, %v824
      %v848 = vpack.c.b16 %v827, %v826
      %v849 = vpack.c.b16 %v829, %v828
      %v850 = vpack.c.b16 %v831, %v830
      %v851 = vpack.c.b16 %v833, %v832
      %v852 = vpack.c.b16 %v835, %v834
      %v853 = vpack.c.b16 %v837, %v836
      %870 = vmatpush.bf16.msra.mxu0 %v845
      %871 = vmatpush.bf16.msra.mxu0 %v844
      %872 = vmatpush.bf16.msra.mxu0 %v843
      %873 = vmatpush.bf16.msra.mxu0 %v842
      %874 = vmatpush.bf16.msra.mxu0 %v841
      %875 = vmatpush.bf16.msra.mxu0 %v840
      %876 = vmatpush.bf16.msra.mxu0 %v839
      %877 = vmatpush.bf16.msra.mxu0 %v838
      %878 = vmatmul.bf16.gmra.mxu0 %v767
      %v879 = vpop.f32.mrf.mxu0
      %v880 = vadd.f32 0.0, %v879
      %v881 = vpop.f32.mrf.mxu0
      %882 = vdwg.mxu0
      %883 = vmatpush.bf16.msra.mxu0 %v853
      %884 = vmatpush.bf16.msra.mxu0 %v852
      %885 = vmatpush.bf16.msra.mxu0 %v851
      %886 = vmatpush.bf16.msra.mxu0 %v850
      %887 = vmatpush.bf16.msra.mxu0 %v849
      %888 = vmatpush.bf16.msra.mxu0 %v848
      %889 = vmatpush.bf16.msra.mxu0 %v847
      %890 = vmatpush.bf16.msra.mxu0 %v846
      %891 = vmatmul.bf16.gmra.mxu0 %v770
      %v892 = vpop.f32.mrf.mxu0
      %v893 = vadd.f32 %v880, %v892
      %v894 = vpop.f32.mrf.mxu0
      %895 = vdwg.mxu0
      %v928 = vunpack.c.l.b16 %v701
      %v929 = vunpack.c.l.b16 %v702
      %v930 = vunpack.c.l.b16 %v703
      %v931 = vunpack.c.l.b16 %v704
      %v932 = vunpack.c.l.b16 %v705
      %v933 = vunpack.c.l.b16 %v706
      %v934 = vunpack.c.l.b16 %v707
      %v935 = vunpack.c.l.b16 %v708
      %v936 = vunpack.c.l.b16 %v709
      %v937 = vunpack.c.l.b16 %v710
      %v938 = vunpack.c.l.b16 %v711
      %v939 = vunpack.c.l.b16 %v712
      %v940 = vunpack.c.l.b16 %v713
      %v941 = vunpack.c.l.b16 %v714
      %v942 = vunpack.c.l.b16 %v715
      %v943 = vunpack.c.l.b16 %v716
      %v944 = vunpack.c.l.b16 %v717
      %v945 = vunpack.c.l.b16 %v718
      %v946 = vunpack.c.l.b16 %v719
      %v947 = vunpack.c.l.b16 %v720
      %v948 = vunpack.c.l.b16 %v721
      %v949 = vunpack.c.l.b16 %v722
      %v950 = vunpack.c.l.b16 %v723
      %v951 = vunpack.c.l.b16 %v724
      %v952 = vunpack.c.l.b16 %v725
      %v953 = vunpack.c.l.b16 %v726
      %v954 = vunpack.c.l.b16 %v727
      %v955 = vunpack.c.l.b16 %v728
      %v956 = vunpack.c.l.b16 %v729
      %v957 = vunpack.c.l.b16 %v730
      %v958 = vunpack.c.l.b16 %v731
      %v959 = vunpack.c.l.b16 %v732
      %v960 = vpack.c.b16 %v929, %v928
      %v961 = vpack.c.b16 %v931, %v930
      %v962 = vpack.c.b16 %v933, %v932
      %v963 = vpack.c.b16 %v935, %v934
      %v964 = vpack.c.b16 %v937, %v936
      %v965 = vpack.c.b16 %v939, %v938
      %v966 = vpack.c.b16 %v941, %v940
      %v967 = vpack.c.b16 %v943, %v942
      %v968 = vpack.c.b16 %v945, %v944
      %v969 = vpack.c.b16 %v947, %v946
      %v970 = vpack.c.b16 %v949, %v948
      %v971 = vpack.c.b16 %v951, %v950
      %v972 = vpack.c.b16 %v953, %v952
      %v973 = vpack.c.b16 %v955, %v954
      %v974 = vpack.c.b16 %v957, %v956
      %v975 = vpack.c.b16 %v959, %v958
      %992 = vmatpush.bf16.msra.mxu0 %v967
      %993 = vmatpush.bf16.msra.mxu0 %v966
      %994 = vmatpush.bf16.msra.mxu0 %v965
      %995 = vmatpush.bf16.msra.mxu0 %v964
      %996 = vmatpush.bf16.msra.mxu0 %v963
      %997 = vmatpush.bf16.msra.mxu0 %v962
      %998 = vmatpush.bf16.msra.mxu0 %v961
      %999 = vmatpush.bf16.msra.mxu0 %v960
      %1000 = vmatmul.bf16.gmra.mxu0 %v699
      %v1001 = vpop.f32.mrf.mxu0
      %v1002 = vadd.f32 %v893, %v1001
      %v1003 = vpop.f32.mrf.mxu0
      %1004 = vdwg.mxu0
      %1005 = vmatpush.bf16.msra.mxu0 %v975
      %1006 = vmatpush.bf16.msra.mxu0 %v974
      %1007 = vmatpush.bf16.msra.mxu0 %v973
      %1008 = vmatpush.bf16.msra.mxu0 %v972
      %1009 = vmatpush.bf16.msra.mxu0 %v971
      %1010 = vmatpush.bf16.msra.mxu0 %v970
      %1011 = vmatpush.bf16.msra.mxu0 %v969
      %1012 = vmatpush.bf16.msra.mxu0 %v968
      %1013 = vmatmul.bf16.gmra.mxu0 %v700
      %v1014 = vpop.f32.mrf.mxu0
      %v1015 = vadd.f32 %v1002, %v1014
      %v1016 = vpop.f32.mrf.mxu0
      %1017 = vdwg.mxu0
      %s1018 = scalar_lea.vmem %s5, 256
      %v1019 = vld [vmem:[%s1018] sm:$0xf]
      %v1020 = vld [vmem:[%s1018 + $0x4] sm:$0xf]
      %v1021 = vld [vmem:[%s1018 + $0x8] sm:$0xf]
      %v1022 = vld [vmem:[%s1018 + $0xc] sm:$0xf]
      %v1023 = vld [vmem:[%s1018 + $0x10] sm:$0xf]
      %v1024 = vld [vmem:[%s1018 + $0x14] sm:$0xf]
      %v1025 = vld [vmem:[%s1018 + $0x18] sm:$0xf]
      %v1026 = vld [vmem:[%s1018 + $0x1c] sm:$0xf]
      %v1027 = vld [vmem:[%s1018 + $0x20] sm:$0xf]
      %v1028 = vld [vmem:[%s1018 + $0x24] sm:$0xf]
      %v1029 = vld [vmem:[%s1018 + $0x28] sm:$0xf]
      %v1030 = vld [vmem:[%s1018 + $0x2c] sm:$0xf]
      %v1031 = vld [vmem:[%s1018 + $0x30] sm:$0xf]
      %v1032 = vld [vmem:[%s1018 + $0x34] sm:$0xf]
      %v1033 = vld [vmem:[%s1018 + $0x38] sm:$0xf]
      %v1034 = vld [vmem:[%s1018 + $0x3c] sm:$0xf]
      %v1035 = vld [vmem:[%s1018 + $0x40] sm:$0xf]
      %v1036 = vld [vmem:[%s1018 + $0x44] sm:$0xf]
      %v1037 = vld [vmem:[%s1018 + $0x48] sm:$0xf]
      %v1038 = vld [vmem:[%s1018 + $0x4c] sm:$0xf]
      %v1039 = vld [vmem:[%s1018 + $0x50] sm:$0xf]
      %v1040 = vld [vmem:[%s1018 + $0x54] sm:$0xf]
      %v1041 = vld [vmem:[%s1018 + $0x58] sm:$0xf]
      %v1042 = vld [vmem:[%s1018 + $0x5c] sm:$0xf]
      %v1043 = vld [vmem:[%s1018 + $0x60] sm:$0xf]
      %v1044 = vld [vmem:[%s1018 + $0x64] sm:$0xf]
      %v1045 = vld [vmem:[%s1018 + $0x68] sm:$0xf]
      %v1046 = vld [vmem:[%s1018 + $0x6c] sm:$0xf]
      %v1047 = vld [vmem:[%s1018 + $0x70] sm:$0xf]
      %v1048 = vld [vmem:[%s1018 + $0x74] sm:$0xf]
      %v1049 = vld [vmem:[%s1018 + $0x78] sm:$0xf]
      %v1050 = vld [vmem:[%s1018 + $0x7c] sm:$0xf]
      %v1053 = vrot.slane %v699, 1
      %v1054 = vrot.slane %v700, 1
      %v1089 = vunpack.c.l.b16 %v1019
      %v1090 = vunpack.c.l.b16 %v1020
      %v1091 = vunpack.c.l.b16 %v1021
      %v1092 = vunpack.c.l.b16 %v1022
      %v1093 = vunpack.c.l.b16 %v1023
      %v1094 = vunpack.c.l.b16 %v1024
      %v1095 = vunpack.c.l.b16 %v1025
      %v1096 = vunpack.c.l.b16 %v1026
      %v1097 = vunpack.c.l.b16 %v1027
      %v1098 = vunpack.c.l.b16 %v1028
      %v1099 = vunpack.c.l.b16 %v1029
      %v1100 = vunpack.c.l.b16 %v1030
      %v1101 = vunpack.c.l.b16 %v1031
      %v1102 = vunpack.c.l.b16 %v1032
      %v1103 = vunpack.c.l.b16 %v1033
      %v1104 = vunpack.c.l.b16 %v1034
      %v1105 = vunpack.c.l.b16 %v1035
      %v1106 = vunpack.c.l.b16 %v1036
      %v1107 = vunpack.c.l.b16 %v1037
      %v1108 = vunpack.c.l.b16 %v1038
      %v1109 = vunpack.c.l.b16 %v1039
      %v1110 = vunpack.c.l.b16 %v1040
      %v1111 = vunpack.c.l.b16 %v1041
      %v1112 = vunpack.c.l.b16 %v1042
      %v1113 = vunpack.c.l.b16 %v1043
      %v1114 = vunpack.c.l.b16 %v1044
      %v1115 = vunpack.c.l.b16 %v1045
      %v1116 = vunpack.c.l.b16 %v1046
      %v1117 = vunpack.c.l.b16 %v1047
      %v1118 = vunpack.c.l.b16 %v1048
      %v1119 = vunpack.c.l.b16 %v1049
      %v1120 = vunpack.c.l.b16 %v1050
      %v1121 = vpack.c.b16 %v1090, %v1089
      %v1122 = vpack.c.b16 %v1092, %v1091
      %v1123 = vpack.c.b16 %v1094, %v1093
      %v1124 = vpack.c.b16 %v1096, %v1095
      %v1125 = vpack.c.b16 %v1098, %v1097
      %v1126 = vpack.c.b16 %v1100, %v1099
      %v1127 = vpack.c.b16 %v1102, %v1101
      %v1128 = vpack.c.b16 %v1104, %v1103
      %v1129 = vpack.c.b16 %v1106, %v1105
      %v1130 = vpack.c.b16 %v1108, %v1107
      %v1131 = vpack.c.b16 %v1110, %v1109
      %v1132 = vpack.c.b16 %v1112, %v1111
      %v1133 = vpack.c.b16 %v1114, %v1113
      %v1134 = vpack.c.b16 %v1116, %v1115
      %v1135 = vpack.c.b16 %v1118, %v1117
      %v1136 = vpack.c.b16 %v1120, %v1119
      %1153 = vmatpush.bf16.msra.mxu0 %v1128
      %1154 = vmatpush.bf16.msra.mxu0 %v1127
      %1155 = vmatpush.bf16.msra.mxu0 %v1126
      %1156 = vmatpush.bf16.msra.mxu0 %v1125
      %1157 = vmatpush.bf16.msra.mxu0 %v1124
      %1158 = vmatpush.bf16.msra.mxu0 %v1123
      %1159 = vmatpush.bf16.msra.mxu0 %v1122
      %1160 = vmatpush.bf16.msra.mxu0 %v1121
      %1161 = vmatmul.bf16.gmra.mxu0 %v1053
      %v1162 = vpop.f32.mrf.mxu0
      %v1163 = vadd.f32 0.0, %v1162
      %v1164 = vpop.f32.mrf.mxu0
      %1165 = vdwg.mxu0
      %1166 = vmatpush.bf16.msra.mxu0 %v1136
      %1167 = vmatpush.bf16.msra.mxu0 %v1135
      %1168 = vmatpush.bf16.msra.mxu0 %v1134
      %1169 = vmatpush.bf16.msra.mxu0 %v1133
      %1170 = vmatpush.bf16.msra.mxu0 %v1132
      %1171 = vmatpush.bf16.msra.mxu0 %v1131
      %1172 = vmatpush.bf16.msra.mxu0 %v1130
      %1173 = vmatpush.bf16.msra.mxu0 %v1129
      %1174 = vmatmul.bf16.gmra.mxu0 %v1054
      %v1175 = vpop.f32.mrf.mxu0
      %v1176 = vadd.f32 %v1163, %v1175
      %v1177 = vpop.f32.mrf.mxu0
      %1178 = vdwg.mxu0
      %v1179 = vadd.f32 %v1015, %v1176
      %s1180 = scalar_lea.vmem %s5, 384
      %v1181 = vld [vmem:[%s1180] sm:$0xf]
      %v1182 = vld [vmem:[%s1180 + $0x4] sm:$0xf]
      %v1183 = vld [vmem:[%s1180 + $0x8] sm:$0xf]
      %v1184 = vld [vmem:[%s1180 + $0xc] sm:$0xf]
      %v1185 = vld [vmem:[%s1180 + $0x10] sm:$0xf]
      %v1186 = vld [vmem:[%s1180 + $0x14] sm:$0xf]
      %v1187 = vld [vmem:[%s1180 + $0x18] sm:$0xf]
      %v1188 = vld [vmem:[%s1180 + $0x1c] sm:$0xf]
      %v1189 = vld [vmem:[%s1180 + $0x20] sm:$0xf]
      %v1190 = vld [vmem:[%s1180 + $0x24] sm:$0xf]
      %v1191 = vld [vmem:[%s1180 + $0x28] sm:$0xf]
      %v1192 = vld [vmem:[%s1180 + $0x2c] sm:$0xf]
      %v1193 = vld [vmem:[%s1180 + $0x30] sm:$0xf]
      %v1194 = vld [vmem:[%s1180 + $0x34] sm:$0xf]
      %v1195 = vld [vmem:[%s1180 + $0x38] sm:$0xf]
      %v1196 = vld [vmem:[%s1180 + $0x3c] sm:$0xf]
      %v1197 = vld [vmem:[%s1180 + $0x40] sm:$0xf]
      %v1198 = vld [vmem:[%s1180 + $0x44] sm:$0xf]
      %v1199 = vld [vmem:[%s1180 + $0x48] sm:$0xf]
      %v1200 = vld [vmem:[%s1180 + $0x4c] sm:$0xf]
      %v1201 = vld [vmem:[%s1180 + $0x50] sm:$0xf]
      %v1202 = vld [vmem:[%s1180 + $0x54] sm:$0xf]
      %v1203 = vld [vmem:[%s1180 + $0x58] sm:$0xf]
      %v1204 = vld [vmem:[%s1180 + $0x5c] sm:$0xf]
      %v1205 = vld [vmem:[%s1180 + $0x60] sm:$0xf]
      %v1206 = vld [vmem:[%s1180 + $0x64] sm:$0xf]
      %v1207 = vld [vmem:[%s1180 + $0x68] sm:$0xf]
      %v1208 = vld [vmem:[%s1180 + $0x6c] sm:$0xf]
      %v1209 = vld [vmem:[%s1180 + $0x70] sm:$0xf]
      %v1210 = vld [vmem:[%s1180 + $0x74] sm:$0xf]
      %v1211 = vld [vmem:[%s1180 + $0x78] sm:$0xf]
      %v1212 = vld [vmem:[%s1180 + $0x7c] sm:$0xf]
      %v1213 = vrot.slane %v767, 1
      %v1214 = vrot.slane %v770, 1
      %v1249 = vunpack.c.l.b16 %v1181
      %v1250 = vunpack.c.l.b16 %v1182
      %v1251 = vunpack.c.l.b16 %v1183
      %v1252 = vunpack.c.l.b16 %v1184
      %v1253 = vunpack.c.l.b16 %v1185
      %v1254 = vunpack.c.l.b16 %v1186
      %v1255 = vunpack.c.l.b16 %v1187
      %v1256 = vunpack.c.l.b16 %v1188
      %v1257 = vunpack.c.l.b16 %v1189
      %v1258 = vunpack.c.l.b16 %v1190
      %v1259 = vunpack.c.l.b16 %v1191
      %v1260 = vunpack.c.l.b16 %v1192
      %v1261 = vunpack.c.l.b16 %v1193
      %v1262 = vunpack.c.l.b16 %v1194
      %v1263 = vunpack.c.l.b16 %v1195
      %v1264 = vunpack.c.l.b16 %v1196
      %v1265 = vunpack.c.l.b16 %v1197
      %v1266 = vunpack.c.l.b16 %v1198
      %v1267 = vunpack.c.l.b16 %v1199
      %v1268 = vunpack.c.l.b16 %v1200
      %v1269 = vunpack.c.l.b16 %v1201
      %v1270 = vunpack.c.l.b16 %v1202
      %v1271 = vunpack.c.l.b16 %v1203
      %v1272 = vunpack.c.l.b16 %v1204
      %v1273 = vunpack.c.l.b16 %v1205
      %v1274 = vunpack.c.l.b16 %v1206
      %v1275 = vunpack.c.l.b16 %v1207
      %v1276 = vunpack.c.l.b16 %v1208
      %v1277 = vunpack.c.l.b16 %v1209
      %v1278 = vunpack.c.l.b16 %v1210
      %v1279 = vunpack.c.l.b16 %v1211
      %v1280 = vunpack.c.l.b16 %v1212
      %v1281 = vpack.c.b16 %v1250, %v1249
      %v1282 = vpack.c.b16 %v1252, %v1251
      %v1283 = vpack.c.b16 %v1254, %v1253
      %v1284 = vpack.c.b16 %v1256, %v1255
      %v1285 = vpack.c.b16 %v1258, %v1257
      %v1286 = vpack.c.b16 %v1260, %v1259
      %v1287 = vpack.c.b16 %v1262, %v1261
      %v1288 = vpack.c.b16 %v1264, %v1263
      %v1289 = vpack.c.b16 %v1266, %v1265
      %v1290 = vpack.c.b16 %v1268, %v1267
      %v1291 = vpack.c.b16 %v1270, %v1269
      %v1292 = vpack.c.b16 %v1272, %v1271
      %v1293 = vpack.c.b16 %v1274, %v1273
      %v1294 = vpack.c.b16 %v1276, %v1275
      %v1295 = vpack.c.b16 %v1278, %v1277
      %v1296 = vpack.c.b16 %v1280, %v1279
      %1313 = vmatpush.bf16.msra.mxu0 %v1288
      %1314 = vmatpush.bf16.msra.mxu0 %v1287
      %1315 = vmatpush.bf16.msra.mxu0 %v1286
      %1316 = vmatpush.bf16.msra.mxu0 %v1285
      %1317 = vmatpush.bf16.msra.mxu0 %v1284
      %1318 = vmatpush.bf16.msra.mxu0 %v1283
      %1319 = vmatpush.bf16.msra.mxu0 %v1282
      %1320 = vmatpush.bf16.msra.mxu0 %v1281
      %1321 = vmatmul.bf16.gmra.mxu0 %v1213
      %v1322 = vpop.f32.mrf.mxu0
      %v1323 = vadd.f32 0.0, %v1322
      %v1324 = vpop.f32.mrf.mxu0
      %1325 = vdwg.mxu0
      %1326 = vmatpush.bf16.msra.mxu0 %v1296
      %1327 = vmatpush.bf16.msra.mxu0 %v1295
      %1328 = vmatpush.bf16.msra.mxu0 %v1294
      %1329 = vmatpush.bf16.msra.mxu0 %v1293
      %1330 = vmatpush.bf16.msra.mxu0 %v1292
      %1331 = vmatpush.bf16.msra.mxu0 %v1291
      %1332 = vmatpush.bf16.msra.mxu0 %v1290
      %1333 = vmatpush.bf16.msra.mxu0 %v1289
      %1334 = vmatmul.bf16.gmra.mxu0 %v1214
      %v1335 = vpop.f32.mrf.mxu0
      %v1336 = vadd.f32 %v1323, %v1335
      %v1337 = vpop.f32.mrf.mxu0
      %1338 = vdwg.mxu0
      %v1339 = vadd.f32 %v1179, %v1336
      %s1340 = scalar_lea.vmem %s5, 512
      %v1341 = vld [vmem:[%s1340] sm:$0xf]
      %v1342 = vld [vmem:[%s1340 + $0x4] sm:$0xf]
      %v1343 = vld [vmem:[%s1340 + $0x8] sm:$0xf]
      %v1344 = vld [vmem:[%s1340 + $0xc] sm:$0xf]
      %v1345 = vld [vmem:[%s1340 + $0x10] sm:$0xf]
      %v1346 = vld [vmem:[%s1340 + $0x14] sm:$0xf]
      %v1347 = vld [vmem:[%s1340 + $0x18] sm:$0xf]
      %v1348 = vld [vmem:[%s1340 + $0x1c] sm:$0xf]
      %v1349 = vld [vmem:[%s1340 + $0x20] sm:$0xf]
      %v1350 = vld [vmem:[%s1340 + $0x24] sm:$0xf]
      %v1351 = vld [vmem:[%s1340 + $0x28] sm:$0xf]
      %v1352 = vld [vmem:[%s1340 + $0x2c] sm:$0xf]
      %v1353 = vld [vmem:[%s1340 + $0x30] sm:$0xf]
      %v1354 = vld [vmem:[%s1340 + $0x34] sm:$0xf]
      %v1355 = vld [vmem:[%s1340 + $0x38] sm:$0xf]
      %v1356 = vld [vmem:[%s1340 + $0x3c] sm:$0xf]
      %v1357 = vld [vmem:[%s1340 + $0x40] sm:$0xf]
      %v1358 = vld [vmem:[%s1340 + $0x44] sm:$0xf]
      %v1359 = vld [vmem:[%s1340 + $0x48] sm:$0xf]
      %v1360 = vld [vmem:[%s1340 + $0x4c] sm:$0xf]
      %v1361 = vld [vmem:[%s1340 + $0x50] sm:$0xf]
      %v1362 = vld [vmem:[%s1340 + $0x54] sm:$0xf]
      %v1363 = vld [vmem:[%s1340 + $0x58] sm:$0xf]
      %v1364 = vld [vmem:[%s1340 + $0x5c] sm:$0xf]
      %v1365 = vld [vmem:[%s1340 + $0x60] sm:$0xf]
      %v1366 = vld [vmem:[%s1340 + $0x64] sm:$0xf]
      %v1367 = vld [vmem:[%s1340 + $0x68] sm:$0xf]
      %v1368 = vld [vmem:[%s1340 + $0x6c] sm:$0xf]
      %v1369 = vld [vmem:[%s1340 + $0x70] sm:$0xf]
      %v1370 = vld [vmem:[%s1340 + $0x74] sm:$0xf]
      %v1371 = vld [vmem:[%s1340 + $0x78] sm:$0xf]
      %v1372 = vld [vmem:[%s1340 + $0x7c] sm:$0xf]
      %v1373 = vrot.slane %v699, 2
      %v1374 = vrot.slane %v700, 2
      %v1409 = vunpack.c.l.b16 %v1341
      %v1410 = vunpack.c.l.b16 %v1342
      %v1411 = vunpack.c.l.b16 %v1343
      %v1412 = vunpack.c.l.b16 %v1344
      %v1413 = vunpack.c.l.b16 %v1345
      %v1414 = vunpack.c.l.b16 %v1346
      %v1415 = vunpack.c.l.b16 %v1347
      %v1416 = vunpack.c.l.b16 %v1348
      %v1417 = vunpack.c.l.b16 %v1349
      %v1418 = vunpack.c.l.b16 %v1350
      %v1419 = vunpack.c.l.b16 %v1351
      %v1420 = vunpack.c.l.b16 %v1352
      %v1421 = vunpack.c.l.b16 %v1353
      %v1422 = vunpack.c.l.b16 %v1354
      %v1423 = vunpack.c.l.b16 %v1355
      %v1424 = vunpack.c.l.b16 %v1356
      %v1425 = vunpack.c.l.b16 %v1357
      %v1426 = vunpack.c.l.b16 %v1358
      %v1427 = vunpack.c.l.b16 %v1359
      %v1428 = vunpack.c.l.b16 %v1360
      %v1429 = vunpack.c.l.b16 %v1361
      %v1430 = vunpack.c.l.b16 %v1362
      %v1431 = vunpack.c.l.b16 %v1363
      %v1432 = vunpack.c.l.b16 %v1364
      %v1433 = vunpack.c.l.b16 %v1365
      %v1434 = vunpack.c.l.b16 %v1366
      %v1435 = vunpack.c.l.b16 %v1367
      %v1436 = vunpack.c.l.b16 %v1368
      %v1437 = vunpack.c.l.b16 %v1369
      %v1438 = vunpack.c.l.b16 %v1370
      %v1439 = vunpack.c.l.b16 %v1371
      %v1440 = vunpack.c.l.b16 %v1372
      %v1441 = vpack.c.b16 %v1410, %v1409
      %v1442 = vpack.c.b16 %v1412, %v1411
      %v1443 = vpack.c.b16 %v1414, %v1413
      %v1444 = vpack.c.b16 %v1416, %v1415
      %v1445 = vpack.c.b16 %v1418, %v1417
      %v1446 = vpack.c.b16 %v1420, %v1419
      %v1447 = vpack.c.b16 %v1422, %v1421
      %v1448 = vpack.c.b16 %v1424, %v1423
      %v1449 = vpack.c.b16 %v1426, %v1425
      %v1450 = vpack.c.b16 %v1428, %v1427
      %v1451 = vpack.c.b16 %v1430, %v1429
      %v1452 = vpack.c.b16 %v1432, %v1431
      %v1453 = vpack.c.b16 %v1434, %v1433
      %v1454 = vpack.c.b16 %v1436, %v1435
      %v1455 = vpack.c.b16 %v1438, %v1437
      %v1456 = vpack.c.b16 %v1440, %v1439
      %1473 = vmatpush.bf16.msra.mxu0 %v1448
      %1474 = vmatpush.bf16.msra.mxu0 %v1447
      %1475 = vmatpush.bf16.msra.mxu0 %v1446
      %1476 = vmatpush.bf16.msra.mxu0 %v1445
      %1477 = vmatpush.bf16.msra.mxu0 %v1444
      %1478 = vmatpush.bf16.msra.mxu0 %v1443
      %1479 = vmatpush.bf16.msra.mxu0 %v1442
      %1480 = vmatpush.bf16.msra.mxu0 %v1441
      %1481 = vmatmul.bf16.gmra.mxu0 %v1373
      %v1482 = vpop.f32.mrf.mxu0
      %v1483 = vadd.f32 0.0, %v1482
      %v1484 = vpop.f32.mrf.mxu0
      %1485 = vdwg.mxu0
      %1486 = vmatpush.bf16.msra.mxu0 %v1456
      %1487 = vmatpush.bf16.msra.mxu0 %v1455
      %1488 = vmatpush.bf16.msra.mxu0 %v1454
      %1489 = vmatpush.bf16.msra.mxu0 %v1453
      %1490 = vmatpush.bf16.msra.mxu0 %v1452
      %1491 = vmatpush.bf16.msra.mxu0 %v1451
      %1492 = vmatpush.bf16.msra.mxu0 %v1450
      %1493 = vmatpush.bf16.msra.mxu0 %v1449
      %1494 = vmatmul.bf16.gmra.mxu0 %v1374
      %v1495 = vpop.f32.mrf.mxu0
      %v1496 = vadd.f32 %v1483, %v1495
      %v1497 = vpop.f32.mrf.mxu0
      %1498 = vdwg.mxu0
      %v1499 = vadd.f32 %v1339, %v1496
      %s1500 = scalar_lea.vmem %s5, 640
      %v1501 = vld [vmem:[%s1500] sm:$0xf]
      %v1502 = vld [vmem:[%s1500 + $0x4] sm:$0xf]
      %v1503 = vld [vmem:[%s1500 + $0x8] sm:$0xf]
      %v1504 = vld [vmem:[%s1500 + $0xc] sm:$0xf]
      %v1505 = vld [vmem:[%s1500 + $0x10] sm:$0xf]
      %v1506 = vld [vmem:[%s1500 + $0x14] sm:$0xf]
      %v1507 = vld [vmem:[%s1500 + $0x18] sm:$0xf]
      %v1508 = vld [vmem:[%s1500 + $0x1c] sm:$0xf]
      %v1509 = vld [vmem:[%s1500 + $0x20] sm:$0xf]
      %v1510 = vld [vmem:[%s1500 + $0x24] sm:$0xf]
      %v1511 = vld [vmem:[%s1500 + $0x28] sm:$0xf]
      %v1512 = vld [vmem:[%s1500 + $0x2c] sm:$0xf]
      %v1513 = vld [vmem:[%s1500 + $0x30] sm:$0xf]
      %v1514 = vld [vmem:[%s1500 + $0x34] sm:$0xf]
      %v1515 = vld [vmem:[%s1500 + $0x38] sm:$0xf]
      %v1516 = vld [vmem:[%s1500 + $0x3c] sm:$0xf]
      %v1517 = vld [vmem:[%s1500 + $0x40] sm:$0xf]
      %v1518 = vld [vmem:[%s1500 + $0x44] sm:$0xf]
      %v1519 = vld [vmem:[%s1500 + $0x48] sm:$0xf]
      %v1520 = vld [vmem:[%s1500 + $0x4c] sm:$0xf]
      %v1521 = vld [vmem:[%s1500 + $0x50] sm:$0xf]
      %v1522 = vld [vmem:[%s1500 + $0x54] sm:$0xf]
      %v1523 = vld [vmem:[%s1500 + $0x58] sm:$0xf]
      %v1524 = vld [vmem:[%s1500 + $0x5c] sm:$0xf]
      %v1525 = vld [vmem:[%s1500 + $0x60] sm:$0xf]
      %v1526 = vld [vmem:[%s1500 + $0x64] sm:$0xf]
      %v1527 = vld [vmem:[%s1500 + $0x68] sm:$0xf]
      %v1528 = vld [vmem:[%s1500 + $0x6c] sm:$0xf]
      %v1529 = vld [vmem:[%s1500 + $0x70] sm:$0xf]
      %v1530 = vld [vmem:[%s1500 + $0x74] sm:$0xf]
      %v1531 = vld [vmem:[%s1500 + $0x78] sm:$0xf]
      %v1532 = vld [vmem:[%s1500 + $0x7c] sm:$0xf]
      %v1533 = vrot.slane %v767, 2
      %v1534 = vrot.slane %v770, 2
      %v1569 = vunpack.c.l.b16 %v1501
      %v1570 = vunpack.c.l.b16 %v1502
      %v1571 = vunpack.c.l.b16 %v1503
      %v1572 = vunpack.c.l.b16 %v1504
      %v1573 = vunpack.c.l.b16 %v1505
      %v1574 = vunpack.c.l.b16 %v1506
      %v1575 = vunpack.c.l.b16 %v1507
      %v1576 = vunpack.c.l.b16 %v1508
      %v1577 = vunpack.c.l.b16 %v1509
      %v1578 = vunpack.c.l.b16 %v1510
      %v1579 = vunpack.c.l.b16 %v1511
      %v1580 = vunpack.c.l.b16 %v1512
      %v1581 = vunpack.c.l.b16 %v1513
      %v1582 = vunpack.c.l.b16 %v1514
      %v1583 = vunpack.c.l.b16 %v1515
      %v1584 = vunpack.c.l.b16 %v1516
      %v1585 = vunpack.c.l.b16 %v1517
      %v1586 = vunpack.c.l.b16 %v1518
      %v1587 = vunpack.c.l.b16 %v1519
      %v1588 = vunpack.c.l.b16 %v1520
      %v1589 = vunpack.c.l.b16 %v1521
      %v1590 = vunpack.c.l.b16 %v1522
      %v1591 = vunpack.c.l.b16 %v1523
      %v1592 = vunpack.c.l.b16 %v1524
      %v1593 = vunpack.c.l.b16 %v1525
      %v1594 = vunpack.c.l.b16 %v1526
      %v1595 = vunpack.c.l.b16 %v1527
      %v1596 = vunpack.c.l.b16 %v1528
      %v1597 = vunpack.c.l.b16 %v1529
      %v1598 = vunpack.c.l.b16 %v1530
      %v1599 = vunpack.c.l.b16 %v1531
      %v1600 = vunpack.c.l.b16 %v1532
      %v1601 = vpack.c.b16 %v1570, %v1569
      %v1602 = vpack.c.b16 %v1572, %v1571
      %v1603 = vpack.c.b16 %v1574, %v1573
      %v1604 = vpack.c.b16 %v1576, %v1575
      %v1605 = vpack.c.b16 %v1578, %v1577
      %v1606 = vpack.c.b16 %v1580, %v1579
      %v1607 = vpack.c.b16 %v1582, %v1581
      %v1608 = vpack.c.b16 %v1584, %v1583
      %v1609 = vpack.c.b16 %v1586, %v1585
      %v1610 = vpack.c.b16 %v1588, %v1587
      %v1611 = vpack.c.b16 %v1590, %v1589
      %v1612 = vpack.c.b16 %v1592, %v1591
      %v1613 = vpack.c.b16 %v1594, %v1593
      %v1614 = vpack.c.b16 %v1596, %v1595
      %v1615 = vpack.c.b16 %v1598, %v1597
      %v1616 = vpack.c.b16 %v1600, %v1599
      %1633 = vmatpush.bf16.msra.mxu0 %v1608
      %1634 = vmatpush.bf16.msra.mxu0 %v1607
      %1635 = vmatpush.bf16.msra.mxu0 %v1606
      %1636 = vmatpush.bf16.msra.mxu0 %v1605
      %1637 = vmatpush.bf16.msra.mxu0 %v1604
      %1638 = vmatpush.bf16.msra.mxu0 %v1603
      %1639 = vmatpush.bf16.msra.mxu0 %v1602
      %1640 = vmatpush.bf16.msra.mxu0 %v1601
      %1641 = vmatmul.bf16.gmra.mxu0 %v1533
      %v1642 = vpop.f32.mrf.mxu0
      %v1643 = vadd.f32 0.0, %v1642
      %v1644 = vpop.f32.mrf.mxu0
      %1645 = vdwg.mxu0
      %1646 = vmatpush.bf16.msra.mxu0 %v1616
      %1647 = vmatpush.bf16.msra.mxu0 %v1615
      %1648 = vmatpush.bf16.msra.mxu0 %v1614
      %1649 = vmatpush.bf16.msra.mxu0 %v1613
      %1650 = vmatpush.bf16.msra.mxu0 %v1612
      %1651 = vmatpush.bf16.msra.mxu0 %v1611
      %1652 = vmatpush.bf16.msra.mxu0 %v1610
      %1653 = vmatpush.bf16.msra.mxu0 %v1609
      %1654 = vmatmul.bf16.gmra.mxu0 %v1534
      %v1655 = vpop.f32.mrf.mxu0
      %v1656 = vadd.f32 %v1643, %v1655
      %v1657 = vpop.f32.mrf.mxu0
      %1658 = vdwg.mxu0
      %v1659 = vadd.f32 %v1499, %v1656
      %s1660 = scalar_lea.vmem %s5, 768
      %v1661 = vld [vmem:[%s1660] sm:$0xf]
      %v1662 = vld [vmem:[%s1660 + $0x4] sm:$0xf]
      %v1663 = vld [vmem:[%s1660 + $0x8] sm:$0xf]
      %v1664 = vld [vmem:[%s1660 + $0xc] sm:$0xf]
      %v1665 = vld [vmem:[%s1660 + $0x10] sm:$0xf]
      %v1666 = vld [vmem:[%s1660 + $0x14] sm:$0xf]
      %v1667 = vld [vmem:[%s1660 + $0x18] sm:$0xf]
      %v1668 = vld [vmem:[%s1660 + $0x1c] sm:$0xf]
      %v1669 = vld [vmem:[%s1660 + $0x20] sm:$0xf]
      %v1670 = vld [vmem:[%s1660 + $0x24] sm:$0xf]
      %v1671 = vld [vmem:[%s1660 + $0x28] sm:$0xf]
      %v1672 = vld [vmem:[%s1660 + $0x2c] sm:$0xf]
      %v1673 = vld [vmem:[%s1660 + $0x30] sm:$0xf]
      %v1674 = vld [vmem:[%s1660 + $0x34] sm:$0xf]
      %v1675 = vld [vmem:[%s1660 + $0x38] sm:$0xf]
      %v1676 = vld [vmem:[%s1660 + $0x3c] sm:$0xf]
      %v1677 = vld [vmem:[%s1660 + $0x40] sm:$0xf]
      %v1678 = vld [vmem:[%s1660 + $0x44] sm:$0xf]
      %v1679 = vld [vmem:[%s1660 + $0x48] sm:$0xf]
      %v1680 = vld [vmem:[%s1660 + $0x4c] sm:$0xf]
      %v1681 = vld [vmem:[%s1660 + $0x50] sm:$0xf]
      %v1682 = vld [vmem:[%s1660 + $0x54] sm:$0xf]
      %v1683 = vld [vmem:[%s1660 + $0x58] sm:$0xf]
      %v1684 = vld [vmem:[%s1660 + $0x5c] sm:$0xf]
      %v1685 = vld [vmem:[%s1660 + $0x60] sm:$0xf]
      %v1686 = vld [vmem:[%s1660 + $0x64] sm:$0xf]
      %v1687 = vld [vmem:[%s1660 + $0x68] sm:$0xf]
      %v1688 = vld [vmem:[%s1660 + $0x6c] sm:$0xf]
      %v1689 = vld [vmem:[%s1660 + $0x70] sm:$0xf]
      %v1690 = vld [vmem:[%s1660 + $0x74] sm:$0xf]
      %v1691 = vld [vmem:[%s1660 + $0x78] sm:$0xf]
      %v1692 = vld [vmem:[%s1660 + $0x7c] sm:$0xf]
      %v1693 = vrot.slane %v699, 3
      %v1694 = vrot.slane %v700, 3
      %v1729 = vunpack.c.l.b16 %v1661
      %v1730 = vunpack.c.l.b16 %v1662
      %v1731 = vunpack.c.l.b16 %v1663
      %v1732 = vunpack.c.l.b16 %v1664
      %v1733 = vunpack.c.l.b16 %v1665
      %v1734 = vunpack.c.l.b16 %v1666
      %v1735 = vunpack.c.l.b16 %v1667
      %v1736 = vunpack.c.l.b16 %v1668
      %v1737 = vunpack.c.l.b16 %v1669
      %v1738 = vunpack.c.l.b16 %v1670
      %v1739 = vunpack.c.l.b16 %v1671
      %v1740 = vunpack.c.l.b16 %v1672
      %v1741 = vunpack.c.l.b16 %v1673
      %v1742 = vunpack.c.l.b16 %v1674
      %v1743 = vunpack.c.l.b16 %v1675
      %v1744 = vunpack.c.l.b16 %v1676
      %v1745 = vunpack.c.l.b16 %v1677
      %v1746 = vunpack.c.l.b16 %v1678
      %v1747 = vunpack.c.l.b16 %v1679
      %v1748 = vunpack.c.l.b16 %v1680
      %v1749 = vunpack.c.l.b16 %v1681
      %v1750 = vunpack.c.l.b16 %v1682
      %v1751 = vunpack.c.l.b16 %v1683
      %v1752 = vunpack.c.l.b16 %v1684
      %v1753 = vunpack.c.l.b16 %v1685
      %v1754 = vunpack.c.l.b16 %v1686
      %v1755 = vunpack.c.l.b16 %v1687
      %v1756 = vunpack.c.l.b16 %v1688
      %v1757 = vunpack.c.l.b16 %v1689
      %v1758 = vunpack.c.l.b16 %v1690
      %v1759 = vunpack.c.l.b16 %v1691
      %v1760 = vunpack.c.l.b16 %v1692
      %v1761 = vpack.c.b16 %v1730, %v1729
      %v1762 = vpack.c.b16 %v1732, %v1731
      %v1763 = vpack.c.b16 %v1734, %v1733
      %v1764 = vpack.c.b16 %v1736, %v1735
      %v1765 = vpack.c.b16 %v1738, %v1737
      %v1766 = vpack.c.b16 %v1740, %v1739
      %v1767 = vpack.c.b16 %v1742, %v1741
      %v1768 = vpack.c.b16 %v1744, %v1743
      %v1769 = vpack.c.b16 %v1746, %v1745
      %v1770 = vpack.c.b16 %v1748, %v1747
      %v1771 = vpack.c.b16 %v1750, %v1749
      %v1772 = vpack.c.b16 %v1752, %v1751
      %v1773 = vpack.c.b16 %v1754, %v1753
      %v1774 = vpack.c.b16 %v1756, %v1755
      %v1775 = vpack.c.b16 %v1758, %v1757
      %v1776 = vpack.c.b16 %v1760, %v1759
      %1793 = vmatpush.bf16.msra.mxu0 %v1768
      %1794 = vmatpush.bf16.msra.mxu0 %v1767
      %1795 = vmatpush.bf16.msra.mxu0 %v1766
      %1796 = vmatpush.bf16.msra.mxu0 %v1765
      %1797 = vmatpush.bf16.msra.mxu0 %v1764
      %1798 = vmatpush.bf16.msra.mxu0 %v1763
      %1799 = vmatpush.bf16.msra.mxu0 %v1762
      %1800 = vmatpush.bf16.msra.mxu0 %v1761
      %1801 = vmatmul.bf16.gmra.mxu0 %v1693
      %v1802 = vpop.f32.mrf.mxu0
      %v1803 = vadd.f32 0.0, %v1802
      %v1804 = vpop.f32.mrf.mxu0
      %1805 = vdwg.mxu0
      %1806 = vmatpush.bf16.msra.mxu0 %v1776
      %1807 = vmatpush.bf16.msra.mxu0 %v1775
      %1808 = vmatpush.bf16.msra.mxu0 %v1774
      %1809 = vmatpush.bf16.msra.mxu0 %v1773
      %1810 = vmatpush.bf16.msra.mxu0 %v1772
      %1811 = vmatpush.bf16.msra.mxu0 %v1771
      %1812 = vmatpush.bf16.msra.mxu0 %v1770
      %1813 = vmatpush.bf16.msra.mxu0 %v1769
      %1814 = vmatmul.bf16.gmra.mxu0 %v1694
      %v1815 = vpop.f32.mrf.mxu0
      %v1816 = vadd.f32 %v1803, %v1815
      %v1817 = vpop.f32.mrf.mxu0
      %1818 = vdwg.mxu0
      %v1819 = vadd.f32 %v1659, %v1816
      %s1820 = scalar_lea.vmem %s5, 896
      %v1821 = vld [vmem:[%s1820] sm:$0xf]
      %v1822 = vld [vmem:[%s1820 + $0x4] sm:$0xf]
      %v1823 = vld [vmem:[%s1820 + $0x8] sm:$0xf]
      %v1824 = vld [vmem:[%s1820 + $0xc] sm:$0xf]
      %v1825 = vld [vmem:[%s1820 + $0x10] sm:$0xf]
      %v1826 = vld [vmem:[%s1820 + $0x14] sm:$0xf]
      %v1827 = vld [vmem:[%s1820 + $0x18] sm:$0xf]
      %v1828 = vld [vmem:[%s1820 + $0x1c] sm:$0xf]
      %v1829 = vld [vmem:[%s1820 + $0x20] sm:$0xf]
      %v1830 = vld [vmem:[%s1820 + $0x24] sm:$0xf]
      %v1831 = vld [vmem:[%s1820 + $0x28] sm:$0xf]
      %v1832 = vld [vmem:[%s1820 + $0x2c] sm:$0xf]
      %v1833 = vld [vmem:[%s1820 + $0x30] sm:$0xf]
      %v1834 = vld [vmem:[%s1820 + $0x34] sm:$0xf]
      %v1835 = vld [vmem:[%s1820 + $0x38] sm:$0xf]
      %v1836 = vld [vmem:[%s1820 + $0x3c] sm:$0xf]
      %v1837 = vld [vmem:[%s1820 + $0x40] sm:$0xf]
      %v1838 = vld [vmem:[%s1820 + $0x44] sm:$0xf]
      %v1839 = vld [vmem:[%s1820 + $0x48] sm:$0xf]
      %v1840 = vld [vmem:[%s1820 + $0x4c] sm:$0xf]
      %v1841 = vld [vmem:[%s1820 + $0x50] sm:$0xf]
      %v1842 = vld [vmem:[%s1820 + $0x54] sm:$0xf]
      %v1843 = vld [vmem:[%s1820 + $0x58] sm:$0xf]
      %v1844 = vld [vmem:[%s1820 + $0x5c] sm:$0xf]
      %v1845 = vld [vmem:[%s1820 + $0x60] sm:$0xf]
      %v1846 = vld [vmem:[%s1820 + $0x64] sm:$0xf]
      %v1847 = vld [vmem:[%s1820 + $0x68] sm:$0xf]
      %v1848 = vld [vmem:[%s1820 + $0x6c] sm:$0xf]
      %v1849 = vld [vmem:[%s1820 + $0x70] sm:$0xf]
      %v1850 = vld [vmem:[%s1820 + $0x74] sm:$0xf]
      %v1851 = vld [vmem:[%s1820 + $0x78] sm:$0xf]
      %v1852 = vld [vmem:[%s1820 + $0x7c] sm:$0xf]
      %v1853 = vrot.slane %v767, 3
      %v1854 = vrot.slane %v770, 3
      %v1889 = vunpack.c.l.b16 %v1821
      %v1890 = vunpack.c.l.b16 %v1822
      %v1891 = vunpack.c.l.b16 %v1823
      %v1892 = vunpack.c.l.b16 %v1824
      %v1893 = vunpack.c.l.b16 %v1825
      %v1894 = vunpack.c.l.b16 %v1826
      %v1895 = vunpack.c.l.b16 %v1827
      %v1896 = vunpack.c.l.b16 %v1828
      %v1897 = vunpack.c.l.b16 %v1829
      %v1898 = vunpack.c.l.b16 %v1830
      %v1899 = vunpack.c.l.b16 %v1831
      %v1900 = vunpack.c.l.b16 %v1832
      %v1901 = vunpack.c.l.b16 %v1833
      %v1902 = vunpack.c.l.b16 %v1834
      %v1903 = vunpack.c.l.b16 %v1835
      %v1904 = vunpack.c.l.b16 %v1836
      %v1905 = vunpack.c.l.b16 %v1837
      %v1906 = vunpack.c.l.b16 %v1838
      %v1907 = vunpack.c.l.b16 %v1839
      %v1908 = vunpack.c.l.b16 %v1840
      %v1909 = vunpack.c.l.b16 %v1841
      %v1910 = vunpack.c.l.b16 %v1842
      %v1911 = vunpack.c.l.b16 %v1843
      %v1912 = vunpack.c.l.b16 %v1844
      %v1913 = vunpack.c.l.b16 %v1845
      %v1914 = vunpack.c.l.b16 %v1846
      %v1915 = vunpack.c.l.b16 %v1847
      %v1916 = vunpack.c.l.b16 %v1848
      %v1917 = vunpack.c.l.b16 %v1849
      %v1918 = vunpack.c.l.b16 %v1850
      %v1919 = vunpack.c.l.b16 %v1851
      %v1920 = vunpack.c.l.b16 %v1852
      %v1921 = vpack.c.b16 %v1890, %v1889
      %v1922 = vpack.c.b16 %v1892, %v1891
      %v1923 = vpack.c.b16 %v1894, %v1893
      %v1924 = vpack.c.b16 %v1896, %v1895
      %v1925 = vpack.c.b16 %v1898, %v1897
      %v1926 = vpack.c.b16 %v1900, %v1899
      %v1927 = vpack.c.b16 %v1902, %v1901
      %v1928 = vpack.c.b16 %v1904, %v1903
      %v1929 = vpack.c.b16 %v1906, %v1905
      %v1930 = vpack.c.b16 %v1908, %v1907
      %v1931 = vpack.c.b16 %v1910, %v1909
      %v1932 = vpack.c.b16 %v1912, %v1911
      %v1933 = vpack.c.b16 %v1914, %v1913
      %v1934 = vpack.c.b16 %v1916, %v1915
      %v1935 = vpack.c.b16 %v1918, %v1917
      %v1936 = vpack.c.b16 %v1920, %v1919
      %1953 = vmatpush.bf16.msra.mxu0 %v1928
      %1954 = vmatpush.bf16.msra.mxu0 %v1927
      %1955 = vmatpush.bf16.msra.mxu0 %v1926
      %1956 = vmatpush.bf16.msra.mxu0 %v1925
      %1957 = vmatpush.bf16.msra.mxu0 %v1924
      %1958 = vmatpush.bf16.msra.mxu0 %v1923
      %1959 = vmatpush.bf16.msra.mxu0 %v1922
      %1960 = vmatpush.bf16.msra.mxu0 %v1921
      %1961 = vmatmul.bf16.gmra.mxu0 %v1853
      %v1962 = vpop.f32.mrf.mxu0
      %v1963 = vadd.f32 0.0, %v1962
      %v1964 = vpop.f32.mrf.mxu0
      %1965 = vdwg.mxu0
      %1966 = vmatpush.bf16.msra.mxu0 %v1936
      %1967 = vmatpush.bf16.msra.mxu0 %v1935
      %1968 = vmatpush.bf16.msra.mxu0 %v1934
      %1969 = vmatpush.bf16.msra.mxu0 %v1933
      %1970 = vmatpush.bf16.msra.mxu0 %v1932
      %1971 = vmatpush.bf16.msra.mxu0 %v1931
      %1972 = vmatpush.bf16.msra.mxu0 %v1930
      %1973 = vmatpush.bf16.msra.mxu0 %v1929
      %1974 = vmatmul.bf16.gmra.mxu0 %v1854
      %v1975 = vpop.f32.mrf.mxu0
      %v1976 = vadd.f32 %v1963, %v1975
      %v1977 = vpop.f32.mrf.mxu0
      %1978 = vdwg.mxu0
      %v1979 = vadd.f32 %v1819, %v1976
      %v1980 = vld [vmem:[%s6] sm:$0x1]
      %v1981 = vadd.f32 %v1979, %v1980
      %v1982 = vld [vmem:[%s428] sm:$0x1]
      %v1984 = vperm.slane %v1982, 0
      %1985 = vrot.lane.b32.xlu0 %v1984, 32
      %v1986 = vpop.permute.xlu0 %1985
      %v1988 = vmul.f32 %v1981, %v1986
      %1990 = vrot.lane.b32.xlu0 %v1981, 32
      %v1991 = vpop.permute.xlu0 %1990
      %v1993 = vadd.f32 %v1988, %v1991
      %v1994 = vpack.c.bf16 %v1993, %v1993
      %vm1995 = vcmask 516096
      %1996 = vst.msk [vmem:[%s436] sm:$0x1] %vm1995, %v1981
      %v1997 = vld [vmem:[%s7] sm:$0xff]
      %v1998 = vld [vmem:[%s7 + $0x8] sm:$0xff]
      %v1999 = vld [vmem:[%s7 + $0x10] sm:$0xff]
      %v2000 = vld [vmem:[%s7 + $0x18] sm:$0xff]
      %v2001 = vld [vmem:[%s8] sm:$0x3]
      %2003 = vrot.lane.b32.xlu0 %v1994, 96
      %v2004 = vpop.permute.xlu0 %2003
      %v2009 = vunpack.c.l.b16 %v1997
      %v2010 = vunpack.c.h.b16 %v1997
      %v2011 = vunpack.c.l.b16 %v1998
      %v2012 = vunpack.c.h.b16 %v1998
      %v2013 = vunpack.c.l.b16 %v1999
      %v2014 = vunpack.c.h.b16 %v1999
      %v2015 = vunpack.c.l.b16 %v2000
      %v2016 = vunpack.c.h.b16 %v2000
      %v2017 = vpack.c.b16 %v2011, %v2009
      %v2018 = vpack.c.b16 %v2012, %v2010
      %v2019 = vpack.c.b16 %v2015, %v2013
      %v2020 = vpack.c.b16 %v2016, %v2014
      %v2026 = vperm.slane %v2001, 0
      %v2027 = vperm.slane %v2001, 1
      %vm2030 = vcmask 261120
      %v2032 = vsel %vm2030, %v2004, 0
      %2034 = vmatpush.bf16.msra.mxu0 0
      %2035 = vmatpush.bf16.msra.mxu0 0
      %2036 = vmatpush.bf16.msra.mxu0 0
      %2037 = vmatpush.bf16.msra.mxu0 0
      %2038 = vmatpush.bf16.msra.mxu0 0
      %2039 = vmatpush.bf16.msra.mxu0 0
      %2040 = vmatpush.bf16.msra.mxu0 %v2019
      %2041 = vmatpush.bf16.msra.mxu0 %v2017
      %2042 = vmatmul.bf16.gmra.mxu0 %v2032
      %v2043 = vpop.f32.mrf.mxu0
      %v2044 = vadd.f32 %v2026, %v2043
      %v2045 = vpop.f32.mrf.mxu0
      %2046 = vdwg.mxu0
      %2047 = vmatpush.bf16.msra.mxu0 0
      %2048 = vmatpush.bf16.msra.mxu0 0
      %2049 = vmatpush.bf16.msra.mxu0 0
      %2050 = vmatpush.bf16.msra.mxu0 0
      %2051 = vmatpush.bf16.msra.mxu0 0
      %2052 = vmatpush.bf16.msra.mxu0 0
      %2053 = vmatpush.bf16.msra.mxu0 %v2020
      %2054 = vmatpush.bf16.msra.mxu0 %v2018
      %2055 = vmatmul.bf16.gmra.mxu0 %v2032
      %v2056 = vpop.f32.mrf.mxu0
      %v2057 = vadd.f32 %v2027, %v2056
      %v2058 = vpop.f32.mrf.mxu0
      %2059 = vdwg.mxu0
      %s2060 = scalar_lea.vmem %s7, 32
      %v2061 = vld [vmem:[%s2060] sm:$0xff]
      %v2062 = vld [vmem:[%s2060 + $0x8] sm:$0xff]
      %v2063 = vld [vmem:[%s2060 + $0x10] sm:$0xff]
      %v2064 = vld [vmem:[%s2060 + $0x18] sm:$0xff]
      %s2065 = scalar_lea.vmem %s8, 2
      %v2066 = vld [vmem:[%s2065] sm:$0x3]
      %v2071 = vunpack.c.l.b16 %v2061
      %v2072 = vunpack.c.h.b16 %v2061
      %v2073 = vunpack.c.l.b16 %v2062
      %v2074 = vunpack.c.h.b16 %v2062
      %v2075 = vunpack.c.l.b16 %v2063
      %v2076 = vunpack.c.h.b16 %v2063
      %v2077 = vunpack.c.l.b16 %v2064
      %v2078 = vunpack.c.h.b16 %v2064
      %v2079 = vpack.c.b16 %v2073, %v2071
      %v2080 = vpack.c.b16 %v2074, %v2072
      %v2081 = vpack.c.b16 %v2077, %v2075
      %v2082 = vpack.c.b16 %v2078, %v2076
      %v2088 = vperm.slane %v2066, 0
      %v2089 = vperm.slane %v2066, 1
      %2092 = vmatpush.bf16.msra.mxu0 0
      %2093 = vmatpush.bf16.msra.mxu0 0
      %2094 = vmatpush.bf16.msra.mxu0 0
      %2095 = vmatpush.bf16.msra.mxu0 0
      %2096 = vmatpush.bf16.msra.mxu0 0
      %2097 = vmatpush.bf16.msra.mxu0 0
      %2098 = vmatpush.bf16.msra.mxu0 %v2081
      %2099 = vmatpush.bf16.msra.mxu0 %v2079
      %2100 = vmatmul.bf16.gmra.mxu0 %v2032
      %v2101 = vpop.f32.mrf.mxu0
      %v2102 = vadd.f32 %v2088, %v2101
      %v2103 = vpop.f32.mrf.mxu0
      %2104 = vdwg.mxu0
      %2105 = vmatpush.bf16.msra.mxu0 0
      %2106 = vmatpush.bf16.msra.mxu0 0
      %2107 = vmatpush.bf16.msra.mxu0 0
      %2108 = vmatpush.bf16.msra.mxu0 0
      %2109 = vmatpush.bf16.msra.mxu0 0
      %2110 = vmatpush.bf16.msra.mxu0 0
      %2111 = vmatpush.bf16.msra.mxu0 %v2082
      %2112 = vmatpush.bf16.msra.mxu0 %v2080
      %2113 = vmatmul.bf16.gmra.mxu0 %v2032
      %v2114 = vpop.f32.mrf.mxu0
      %v2115 = vadd.f32 %v2089, %v2114
      %v2116 = vpop.f32.mrf.mxu0
      %2117 = vdwg.mxu0
      %s2118 = scalar_lea.vmem %s7, 64
      %v2119 = vld [vmem:[%s2118] sm:$0xff]
      %v2120 = vld [vmem:[%s2118 + $0x8] sm:$0xff]
      %v2121 = vld [vmem:[%s2118 + $0x10] sm:$0xff]
      %v2122 = vld [vmem:[%s2118 + $0x18] sm:$0xff]
      %s2123 = scalar_lea.vmem %s8, 4
      %v2124 = vld [vmem:[%s2123] sm:$0x3]
      %v2129 = vunpack.c.l.b16 %v2119
      %v2130 = vunpack.c.h.b16 %v2119
      %v2131 = vunpack.c.l.b16 %v2120
      %v2132 = vunpack.c.h.b16 %v2120
      %v2133 = vunpack.c.l.b16 %v2121
      %v2134 = vunpack.c.h.b16 %v2121
      %v2135 = vunpack.c.l.b16 %v2122
      %v2136 = vunpack.c.h.b16 %v2122
      %v2137 = vpack.c.b16 %v2131, %v2129
      %v2138 = vpack.c.b16 %v2132, %v2130
      %v2139 = vpack.c.b16 %v2135, %v2133
      %v2140 = vpack.c.b16 %v2136, %v2134
      %v2146 = vperm.slane %v2124, 0
      %v2147 = vperm.slane %v2124, 1
      %2150 = vmatpush.bf16.msra.mxu0 0
      %2151 = vmatpush.bf16.msra.mxu0 0
      %2152 = vmatpush.bf16.msra.mxu0 0
      %2153 = vmatpush.bf16.msra.mxu0 0
      %2154 = vmatpush.bf16.msra.mxu0 0
      %2155 = vmatpush.bf16.msra.mxu0 0
      %2156 = vmatpush.bf16.msra.mxu0 %v2139
      %2157 = vmatpush.bf16.msra.mxu0 %v2137
      %2158 = vmatmul.bf16.gmra.mxu0 %v2032
      %v2159 = vpop.f32.mrf.mxu0
      %v2160 = vadd.f32 %v2146, %v2159
      %v2161 = vpop.f32.mrf.mxu0
      %2162 = vdwg.mxu0
      %2163 = vmatpush.bf16.msra.mxu0 0
      %2164 = vmatpush.bf16.msra.mxu0 0
      %2165 = vmatpush.bf16.msra.mxu0 0
      %2166 = vmatpush.bf16.msra.mxu0 0
      %2167 = vmatpush.bf16.msra.mxu0 0
      %2168 = vmatpush.bf16.msra.mxu0 0
      %2169 = vmatpush.bf16.msra.mxu0 %v2140
      %2170 = vmatpush.bf16.msra.mxu0 %v2138
      %2171 = vmatmul.bf16.gmra.mxu0 %v2032
      %v2172 = vpop.f32.mrf.mxu0
      %v2173 = vadd.f32 %v2147, %v2172
      %v2174 = vpop.f32.mrf.mxu0
      %2175 = vdwg.mxu0
      %s2176 = scalar_lea.vmem %s7, 96
      %v2177 = vld [vmem:[%s2176] sm:$0xff]
      %v2178 = vld [vmem:[%s2176 + $0x8] sm:$0xff]
      %v2179 = vld [vmem:[%s2176 + $0x10] sm:$0xff]
      %v2180 = vld [vmem:[%s2176 + $0x18] sm:$0xff]
      %s2181 = scalar_lea.vmem %s8, 6
      %v2182 = vld [vmem:[%s2181] sm:$0x3]
      %v2187 = vunpack.c.l.b16 %v2177
      %v2188 = vunpack.c.h.b16 %v2177
      %v2189 = vunpack.c.l.b16 %v2178
      %v2190 = vunpack.c.h.b16 %v2178
      %v2191 = vunpack.c.l.b16 %v2179
      %v2192 = vunpack.c.h.b16 %v2179
      %v2193 = vunpack.c.l.b16 %v2180
      %v2194 = vunpack.c.h.b16 %v2180
      %v2195 = vpack.c.b16 %v2189, %v2187
      %v2196 = vpack.c.b16 %v2190, %v2188
      %v2197 = vpack.c.b16 %v2193, %v2191
      %v2198 = vpack.c.b16 %v2194, %v2192
      %v2204 = vperm.slane %v2182, 0
      %v2205 = vperm.slane %v2182, 1
      %2208 = vmatpush.bf16.msra.mxu0 0
      %2209 = vmatpush.bf16.msra.mxu0 0
      %2210 = vmatpush.bf16.msra.mxu0 0
      %2211 = vmatpush.bf16.msra.mxu0 0
      %2212 = vmatpush.bf16.msra.mxu0 0
      %2213 = vmatpush.bf16.msra.mxu0 0
      %2214 = vmatpush.bf16.msra.mxu0 %v2197
      %2215 = vmatpush.bf16.msra.mxu0 %v2195
      %2216 = vmatmul.bf16.gmra.mxu0 %v2032
      %v2217 = vpop.f32.mrf.mxu0
      %v2218 = vadd.f32 %v2204, %v2217
      %v2219 = vpop.f32.mrf.mxu0
      %2220 = vdwg.mxu0
      %2221 = vmatpush.bf16.msra.mxu0 0
      %2222 = vmatpush.bf16.msra.mxu0 0
      %2223 = vmatpush.bf16.msra.mxu0 0
      %2224 = vmatpush.bf16.msra.mxu0 0
      %2225 = vmatpush.bf16.msra.mxu0 0
      %2226 = vmatpush.bf16.msra.mxu0 0
      %2227 = vmatpush.bf16.msra.mxu0 %v2198
      %2228 = vmatpush.bf16.msra.mxu0 %v2196
      %2229 = vmatmul.bf16.gmra.mxu0 %v2032
      %v2230 = vpop.f32.mrf.mxu0
      %v2231 = vadd.f32 %v2205, %v2230
      %v2232 = vpop.f32.mrf.mxu0
      %2233 = vdwg.mxu0
      %s2234 = scalar_lea.vmem %s7, 128
      %v2235 = vld [vmem:[%s2234] sm:$0xff]
      %v2236 = vld [vmem:[%s2234 + $0x8] sm:$0xff]
      %v2237 = vld [vmem:[%s2234 + $0x10] sm:$0xff]
      %v2238 = vld [vmem:[%s2234 + $0x18] sm:$0xff]
      %s2239 = scalar_lea.vmem %s8, 8
      %v2240 = vld [vmem:[%s2239] sm:$0x3]
      %v2245 = vunpack.c.l.b16 %v2235
      %v2246 = vunpack.c.h.b16 %v2235
      %v2247 = vunpack.c.l.b16 %v2236
      %v2248 = vunpack.c.h.b16 %v2236
      %v2249 = vunpack.c.l.b16 %v2237
      %v2250 = vunpack.c.h.b16 %v2237
      %v2251 = vunpack.c.l.b16 %v2238
      %v2252 = vunpack.c.h.b16 %v2238
      %v2253 = vpack.c.b16 %v2247, %v2245
      %v2254 = vpack.c.b16 %v2248, %v2246
      %v2255 = vpack.c.b16 %v2251, %v2249
      %v2256 = vpack.c.b16 %v2252, %v2250
      %v2262 = vperm.slane %v2240, 0
      %v2263 = vperm.slane %v2240, 1
      %2266 = vmatpush.bf16.msra.mxu0 0
      %2267 = vmatpush.bf16.msra.mxu0 0
      %2268 = vmatpush.bf16.msra.mxu0 0
      %2269 = vmatpush.bf16.msra.mxu0 0
      %2270 = vmatpush.bf16.msra.mxu0 0
      %2271 = vmatpush.bf16.msra.mxu0 0
      %2272 = vmatpush.bf16.msra.mxu0 %v2255
      %2273 = vmatpush.bf16.msra.mxu0 %v2253
      %2274 = vmatmul.bf16.gmra.mxu0 %v2032
      %v2275 = vpop.f32.mrf.mxu0
      %v2276 = vadd.f32 %v2262, %v2275
      %v2277 = vpop.f32.mrf.mxu0
      %2278 = vdwg.mxu0
      %2279 = vmatpush.bf16.msra.mxu0 0
      %2280 = vmatpush.bf16.msra.mxu0 0
      %2281 = vmatpush.bf16.msra.mxu0 0
      %2282 = vmatpush.bf16.msra.mxu0 0
      %2283 = vmatpush.bf16.msra.mxu0 0
      %2284 = vmatpush.bf16.msra.mxu0 0
      %2285 = vmatpush.bf16.msra.mxu0 %v2256
      %2286 = vmatpush.bf16.msra.mxu0 %v2254
      %2287 = vmatmul.bf16.gmra.mxu0 %v2032
      %v2288 = vpop.f32.mrf.mxu0
      %v2289 = vadd.f32 %v2263, %v2288
      %v2290 = vpop.f32.mrf.mxu0
      %2291 = vdwg.mxu0
      %s2292 = scalar_lea.vmem %s7, 160
      %v2293 = vld [vmem:[%s2292] sm:$0xff]
      %v2294 = vld [vmem:[%s2292 + $0x8] sm:$0xff]
      %v2295 = vld [vmem:[%s2292 + $0x10] sm:$0xff]
      %v2296 = vld [vmem:[%s2292 + $0x18] sm:$0xff]
      %s2297 = scalar_lea.vmem %s8, 10
      %v2298 = vld [vmem:[%s2297] sm:$0x3]
      %v2303 = vunpack.c.l.b16 %v2293
      %v2304 = vunpack.c.h.b16 %v2293
      %v2305 = vunpack.c.l.b16 %v2294
      %v2306 = vunpack.c.h.b16 %v2294
      %v2307 = vunpack.c.l.b16 %v2295
      %v2308 = vunpack.c.h.b16 %v2295
      %v2309 = vunpack.c.l.b16 %v2296
      %v2310 = vunpack.c.h.b16 %v2296
      %v2311 = vpack.c.b16 %v2305, %v2303
      %v2312 = vpack.c.b16 %v2306, %v2304
      %v2313 = vpack.c.b16 %v2309, %v2307
      %v2314 = vpack.c.b16 %v2310, %v2308
      %v2320 = vperm.slane %v2298, 0
      %v2321 = vperm.slane %v2298, 1
      %2324 = vmatpush.bf16.msra.mxu0 0
      %2325 = vmatpush.bf16.msra.mxu0 0
      %2326 = vmatpush.bf16.msra.mxu0 0
      %2327 = vmatpush.bf16.msra.mxu0 0
      %2328 = vmatpush.bf16.msra.mxu0 0
      %2329 = vmatpush.bf16.msra.mxu0 0
      %2330 = vmatpush.bf16.msra.mxu0 %v2313
      %2331 = vmatpush.bf16.msra.mxu0 %v2311
      %2332 = vmatmul.bf16.gmra.mxu0 %v2032
      %v2333 = vpop.f32.mrf.mxu0
      %v2334 = vadd.f32 %v2320, %v2333
      %v2335 = vpop.f32.mrf.mxu0
      %2336 = vdwg.mxu0
      %2337 = vmatpush.bf16.msra.mxu0 0
      %2338 = vmatpush.bf16.msra.mxu0 0
      %2339 = vmatpush.bf16.msra.mxu0 0
      %2340 = vmatpush.bf16.msra.mxu0 0
      %2341 = vmatpush.bf16.msra.mxu0 0
      %2342 = vmatpush.bf16.msra.mxu0 0
      %2343 = vmatpush.bf16.msra.mxu0 %v2314
      %2344 = vmatpush.bf16.msra.mxu0 %v2312
      %2345 = vmatmul.bf16.gmra.mxu0 %v2032
      %v2346 = vpop.f32.mrf.mxu0
      %v2347 = vadd.f32 %v2321, %v2346
      %v2348 = vpop.f32.mrf.mxu0
      %2349 = vdwg.mxu0
      %s2350 = scalar_lea.vmem %s7, 192
      %v2351 = vld [vmem:[%s2350] sm:$0xff]
      %v2352 = vld [vmem:[%s2350 + $0x8] sm:$0xff]
      %v2353 = vld [vmem:[%s2350 + $0x10] sm:$0xff]
      %v2354 = vld [vmem:[%s2350 + $0x18] sm:$0xff]
      %s2355 = scalar_lea.vmem %s8, 12
      %v2356 = vld [vmem:[%s2355] sm:$0x3]
      %v2361 = vunpack.c.l.b16 %v2351
      %v2362 = vunpack.c.h.b16 %v2351
      %v2363 = vunpack.c.l.b16 %v2352
      %v2364 = vunpack.c.h.b16 %v2352
      %v2365 = vunpack.c.l.b16 %v2353
      %v2366 = vunpack.c.h.b16 %v2353
      %v2367 = vunpack.c.l.b16 %v2354
      %v2368 = vunpack.c.h.b16 %v2354
      %v2369 = vpack.c.b16 %v2363, %v2361
      %v2370 = vpack.c.b16 %v2364, %v2362
      %v2371 = vpack.c.b16 %v2367, %v2365
      %v2372 = vpack.c.b16 %v2368, %v2366
      %v2378 = vperm.slane %v2356, 0
      %v2379 = vperm.slane %v2356, 1
      %2382 = vmatpush.bf16.msra.mxu0 0
      %2383 = vmatpush.bf16.msra.mxu0 0
      %2384 = vmatpush.bf16.msra.mxu0 0
      %2385 = vmatpush.bf16.msra.mxu0 0
      %2386 = vmatpush.bf16.msra.mxu0 0
      %2387 = vmatpush.bf16.msra.mxu0 0
      %2388 = vmatpush.bf16.msra.mxu0 %v2371
      %2389 = vmatpush.bf16.msra.mxu0 %v2369
      %2390 = vmatmul.bf16.gmra.mxu0 %v2032
      %v2391 = vpop.f32.mrf.mxu0
      %v2392 = vadd.f32 %v2378, %v2391
      %v2393 = vpop.f32.mrf.mxu0
      %2394 = vdwg.mxu0
      %2395 = vmatpush.bf16.msra.mxu0 0
      %2396 = vmatpush.bf16.msra.mxu0 0
      %2397 = vmatpush.bf16.msra.mxu0 0
      %2398 = vmatpush.bf16.msra.mxu0 0
      %2399 = vmatpush.bf16.msra.mxu0 0
      %2400 = vmatpush.bf16.msra.mxu0 0
      %2401 = vmatpush.bf16.msra.mxu0 %v2372
      %2402 = vmatpush.bf16.msra.mxu0 %v2370
      %2403 = vmatmul.bf16.gmra.mxu0 %v2032
      %v2404 = vpop.f32.mrf.mxu0
      %v2405 = vadd.f32 %v2379, %v2404
      %v2406 = vpop.f32.mrf.mxu0
      %2407 = vdwg.mxu0
      %s2408 = scalar_lea.vmem %s7, 224
      %v2409 = vld [vmem:[%s2408] sm:$0xff]
      %v2410 = vld [vmem:[%s2408 + $0x8] sm:$0xff]
      %v2411 = vld [vmem:[%s2408 + $0x10] sm:$0xff]
      %v2412 = vld [vmem:[%s2408 + $0x18] sm:$0xff]
      %s2413 = scalar_lea.vmem %s8, 14
      %v2414 = vld [vmem:[%s2413] sm:$0x3]
      %v2419 = vunpack.c.l.b16 %v2409
      %v2420 = vunpack.c.h.b16 %v2409
      %v2421 = vunpack.c.l.b16 %v2410
      %v2422 = vunpack.c.h.b16 %v2410
      %v2423 = vunpack.c.l.b16 %v2411
      %v2424 = vunpack.c.h.b16 %v2411
      %v2425 = vunpack.c.l.b16 %v2412
      %v2426 = vunpack.c.h.b16 %v2412
      %v2427 = vpack.c.b16 %v2421, %v2419
      %v2428 = vpack.c.b16 %v2422, %v2420
      %v2429 = vpack.c.b16 %v2425, %v2423
      %v2430 = vpack.c.b16 %v2426, %v2424
      %v2436 = vperm.slane %v2414, 0
      %v2437 = vperm.slane %v2414, 1
      %2440 = vmatpush.bf16.msra.mxu0 0
      %2441 = vmatpush.bf16.msra.mxu0 0
      %2442 = vmatpush.bf16.msra.mxu0 0
      %2443 = vmatpush.bf16.msra.mxu0 0
      %2444 = vmatpush.bf16.msra.mxu0 0
      %2445 = vmatpush.bf16.msra.mxu0 0
      %2446 = vmatpush.bf16.msra.mxu0 %v2429
      %2447 = vmatpush.bf16.msra.mxu0 %v2427
      %2448 = vmatmul.bf16.gmra.mxu0 %v2032
      %v2449 = vpop.f32.mrf.mxu0
      %v2450 = vadd.f32 %v2436, %v2449
      %v2451 = vpop.f32.mrf.mxu0
      %2452 = vdwg.mxu0
      %2453 = vmatpush.bf16.msra.mxu0 0
      %2454 = vmatpush.bf16.msra.mxu0 0
      %2455 = vmatpush.bf16.msra.mxu0 0
      %2456 = vmatpush.bf16.msra.mxu0 0
      %2457 = vmatpush.bf16.msra.mxu0 0
      %2458 = vmatpush.bf16.msra.mxu0 0
      %2459 = vmatpush.bf16.msra.mxu0 %v2430
      %2460 = vmatpush.bf16.msra.mxu0 %v2428
      %2461 = vmatmul.bf16.gmra.mxu0 %v2032
      %v2462 = vpop.f32.mrf.mxu0
      %v2463 = vadd.f32 %v2437, %v2462
      %v2464 = vpop.f32.mrf.mxu0
      %2465 = vdwg.mxu0
      %v2466 = vld [vmem:[%s9] sm:$0xf]
      %v2467 = vld [vmem:[%s10] sm:$0xf]
      %v2470 = vrot.slane %v2102, 7
      %v2471 = vrot.slane %v2115, 7
      %v2476 = vrot.slane %v2160, 6
      %v2477 = vrot.slane %v2173, 6
      %v2482 = vrot.slane %v2218, 5
      %v2483 = vrot.slane %v2231, 5
      %v2488 = vrot.slane %v2276, 4
      %v2489 = vrot.slane %v2289, 4
      %v2494 = vrot.slane %v2334, 3
      %v2495 = vrot.slane %v2347, 3
      %v2500 = vrot.slane %v2392, 2
      %v2501 = vrot.slane %v2405, 2
      %v2506 = vrot.slane %v2450, 1
      %v2507 = vrot.slane %v2463, 1
      %vm2510 = vcmask 1040384
      %v2511 = vsel %vm2510, %v2044, %v2470
      %v2512 = vsel %vm2510, %v2057, %v2471
      %vm2513 = vcmask 1041408
      %v2514 = vsel %vm2513, %v2511, %v2476
      %v2515 = vsel %vm2513, %v2512, %v2477
      %vm2516 = vcmask 1042432
      %v2517 = vsel %vm2516, %v2514, %v2482
      %v2518 = vsel %vm2516, %v2515, %v2483
      %v2519 = vsel %vm633, %v2517, %v2488
      %v2520 = vsel %vm633, %v2518, %v2489
      %vm2521 = vcmask 1044480
      %v2522 = vsel %vm2521, %v2519, %v2494
      %v2523 = vsel %vm2521, %v2520, %v2495
      %vm2524 = vcmask 1045504
      %v2525 = vsel %vm2524, %v2522, %v2500
      %v2526 = vsel %vm2524, %v2523, %v2501
      %vm2527 = vcmask 1046528
      %v2528 = vsel %vm2527, %v2525, %v2506
      %v2529 = vsel %vm2527, %v2526, %v2507
      %2530 = vrot.lane.b32.xlu0 %v2528, 17
      %v2531 = vpop.permute.xlu0 %2530
      %2532 = vrot.lane.b32.xlu0 %v2529, 17
      %v2533 = vpop.permute.xlu0 %2532
      %v2534 = vsel %vm461, %v2531, %v2533
      %v2535 = vsel %vm461, %v2533, %v2531
      %v2536 = vmul.f32 %v2535, %v465
      %v2537 = vmul.f32 %v2534, %v466
      %2538 = vrot.lane.b32.xlu0 %v2528, 16
      %v2539 = vpop.permute.xlu0 %2538
      %2540 = vrot.lane.b32.xlu0 %v2529, 16
      %v2541 = vpop.permute.xlu0 %2540
      %v2542 = vsel %vm480, %v2539, %v2541
      %v2543 = vsel %vm480, %v2541, %v2539
      %v2544 = vmul.f32 %v2543, %v484
      %v2545 = vmul.f32 %v2542, %v485
      %2546 = vrot.lane.b32.xlu0 %v2528, 15
      %v2547 = vpop.permute.xlu0 %2546
      %2548 = vrot.lane.b32.xlu0 %v2529, 15
      %v2549 = vpop.permute.xlu0 %2548
      %v2550 = vsel %vm499, %v2547, %v2549
      %v2551 = vsel %vm499, %v2549, %v2547
      %v2552 = vmul.f32 %v2551, %v503
      %v2553 = vmul.f32 %v2550, %v504
      %2554 = vrot.lane.b32.xlu0 %v2528, 1
      %v2555 = vpop.permute.xlu0 %2554
      %2556 = vrot.lane.b32.xlu0 %v2529, 1
      %v2557 = vpop.permute.xlu0 %2556
      %v2558 = vsel %vm518, %v2555, %v2557
      %v2559 = vsel %vm518, %v2557, %v2555
      %v2560 = vmul.f32 %v2559, %v522
      %v2561 = vmul.f32 %v2558, %v523
      %2562 = vrot.lane.b32.xlu0 %v2528, 127
      %v2563 = vpop.permute.xlu0 %2562
      %2564 = vrot.lane.b32.xlu0 %v2529, 127
      %v2565 = vpop.permute.xlu0 %2564
      %v2566 = vsel %vm537, %v2563, %v2565
      %v2567 = vsel %vm537, %v2565, %v2563
      %v2568 = vmul.f32 %v2566, %v541
      %v2569 = vmul.f32 %v2567, %v542
      %2570 = vrot.lane.b32.xlu0 %v2528, 113
      %v2571 = vpop.permute.xlu0 %2570
      %2572 = vrot.lane.b32.xlu0 %v2529, 113
      %v2573 = vpop.permute.xlu0 %2572
      %v2574 = vsel %vm556, %v2571, %v2573
      %v2575 = vsel %vm556, %v2573, %v2571
      %v2576 = vmul.f32 %v2574, %v560
      %v2577 = vmul.f32 %v2575, %v561
      %2578 = vrot.lane.b32.xlu0 %v2528, 112
      %v2579 = vpop.permute.xlu0 %2578
      %2580 = vrot.lane.b32.xlu0 %v2529, 112
      %v2581 = vpop.permute.xlu0 %2580
      %v2582 = vsel %vm575, %v2579, %v2581
      %v2583 = vsel %vm575, %v2581, %v2579
      %v2584 = vmul.f32 %v2582, %v579
      %v2585 = vmul.f32 %v2583, %v580
      %2586 = vrot.lane.b32.xlu0 %v2528, 111
      %v2587 = vpop.permute.xlu0 %2586
      %2588 = vrot.lane.b32.xlu0 %v2529, 111
      %v2589 = vpop.permute.xlu0 %2588
      %v2590 = vsel %vm594, %v2587, %v2589
      %v2591 = vsel %vm594, %v2589, %v2587
      %v2592 = vmul.f32 %v2590, %v598
      %v2593 = vmul.f32 %v2591, %v599
      %2595 = vset.pattern.permute.xlu0 0
      %2596 = vperm.xlu0 %2595, %v2467
      %v2597 = vpop.permute.xlu0 %2596
      %vm2599 = vcmask 588800
      %v2601 = vsel %vm2599, %v2466, 0
      %2603 = vmatpush.msra.mxu0 0.0
      %2604 = vmatpush.msra.mxu0 0.0
      %2605 = vmatpush.msra.mxu0 0.0
      %2606 = vmatpush.msra.mxu0 0.0
      %2607 = vmatpush.msra.mxu0 0.0
      %2608 = vmatpush.msra.mxu0 0.0
      %2609 = vmatpush.msra.mxu0 0.0
      %2610 = vmatpush.msra.mxu0 %v2592
      %2611 = vmatpush.msra.mxu0 %v2584
      %2612 = vmatpush.msra.mxu0 %v2576
      %2613 = vmatpush.msra.mxu0 %v2568
      %2614 = vmatpush.msra.mxu0 %v2528
      %2615 = vmatpush.msra.mxu0 %v2560
      %2616 = vmatpush.msra.mxu0 %v2552
      %2617 = vmatpush.msra.mxu0 %v2544
      %2618 = vmatpush.msra.mxu0 %v2536
      %2619 = vmatmul.f32.gmra.mxu0 %v2601
      %v2620 = vpop.f32.mrf.mxu0
      %v2621 = vadd.f32 %v2597, %v2620
      %2622 = vdwg.mxu0
      %2623 = vmatpush.msra.mxu0 0.0
      %2624 = vmatpush.msra.mxu0 0.0
      %2625 = vmatpush.msra.mxu0 0.0
      %2626 = vmatpush.msra.mxu0 0.0
      %2627 = vmatpush.msra.mxu0 0.0
      %2628 = vmatpush.msra.mxu0 0.0
      %2629 = vmatpush.msra.mxu0 0.0
      %2630 = vmatpush.msra.mxu0 %v2593
      %2631 = vmatpush.msra.mxu0 %v2585
      %2632 = vmatpush.msra.mxu0 %v2577
      %2633 = vmatpush.msra.mxu0 %v2569
      %2634 = vmatpush.msra.mxu0 %v2529
      %2635 = vmatpush.msra.mxu0 %v2561
      %2636 = vmatpush.msra.mxu0 %v2553
      %2637 = vmatpush.msra.mxu0 %v2545
      %2638 = vmatpush.msra.mxu0 %v2537
      %2639 = vmatmul.f32.gmra.mxu0 %v2601
      %v2640 = vpop.f32.mrf.mxu0
      %v2641 = vadd.f32 %v2597, %v2640
      %2642 = vdwg.mxu0
      %v2643 = vtanh.pop %v2621
      %v2644 = vtanh.pop %v2641
      %v2647 = vrot.slane %v2644, 4
      %v2648 = vsel %vm633, %v2643, %v2647
      %2650 = vst [vmem:[%s433] sm:$0xff] %v2648
      %p2651 = scmp.lt.s32.totalorder %s24, 1
      %s2652 = scalar_select %p2651, %s24, 1
      %s2653 = smul.addr %s2652, 2
      %s2654 = smul.addr %s2653, 4
      %s2655 = scalar_lea.vmem %s11, %s2654
      %p2656 = scmp.lt.s32.totalorder %s24, 1
      %s2657 = scalar_select %p2656, %s24, 1
      %s2658 = scalar_lea.vmem %s12, %s2657
      // Predicated region
      $region65: #{vae_forward.1} parent=63 // pred_check
        %p2659 = pneg %p283
      $region66: #{vae_forward.1} parent=63 // pred_check_branch
        %2661 = sbr.rel (%p2659) target = $region68
      $region67: #{vae_forward.1} parent=63 // pred_region
        _
      $region68: #{vae_forward.1} parent=63 // pred_fallthru
        _
      // Predicated region
      $region69: #{vae_forward.1} parent=63 // pred_check
        %p2662 = pneg %p309
      $region70: #{vae_forward.1} parent=63 // pred_check_branch
        %2664 = sbr.rel (%p2662) target = $region72
      $region71: #{vae_forward.1} parent=63 // pred_region
        _
      $region72: #{vae_forward.1} parent=63 // pred_fallthru
        _
    $region64: #{vae_forward.1} parent=5 // pred_fallthru
      _
    %p2665 = scmp.le.s32.totalorder 2, %s19
    // Predicated region
    $region73: #{vae_forward.1} parent=5 // pred_check
      %p2666 = pneg %p2665
    $region74: #{vae_forward.1} parent=5 // pred_check_branch
      %2668 = sbr.rel (%p2666) target = $region76
    $region75: #{vae_forward.1} parent=5 // pred_region
      %s2669 = ssub.s32 %s19, 2
      // Predicated region
      $region77: #{vae_forward.1} parent=75 // pred_check
        %p2670 = pneg %p289
      $region78: #{vae_forward.1} parent=75 // pred_check_branch
        %2672 = sbr.rel (%p2670) target = $region80
      $region79: #{vae_forward.1} parent=75 // pred_region
        %p2673 = scmp.lt.s32.totalorder %s25, 1
        %s2674 = scalar_select %p2673, %s25, 1
        %s2675 = smul.addr %s2674, 2
        %s2676 = smul.addr %s2675, 4
        %s2677 = scalar_lea.vmem %s11, %s2676
      $region80: #{vae_forward.1} parent=75 // pred_fallthru
        _
      // Predicated region
      $region81: #{vae_forward.1} parent=75 // pred_check
        %p2678 = pneg %p315
      $region82: #{vae_forward.1} parent=75 // pred_check_branch
        %2680 = sbr.rel (%p2678) target = $region84
      $region83: #{vae_forward.1} parent=75 // pred_region
        %p2681 = scmp.lt.s32.totalorder %s25, 1
        %s2682 = scalar_select %p2681, %s25, 1
        %s2683 = scalar_lea.vmem %s12, %s2682
      $region84: #{vae_forward.1} parent=75 // pred_fallthru
        _
    $region76: #{vae_forward.1} parent=5 // pred_fallthru
      _
  $region6: #{vae_forward.1} parent=0 // loop_footer
    %s23 = sadd.s32 1, %s19
  $region7: #{vae_forward.1} parent=0 // loop_footer_branch
    %18 = sbr.rel target = $region3
  $region8: #{vae_forward.1} parent=0 // loop_exit
    _

</llo_original>
